<compile_context>
chip_gen: v7x
topology: tpu7x:2x2x1
jax: 0.10.0
libtpu: 0.0.40
codegen_flags: <defaults>
</compile_context>

<pallas_src>
import functools

import jax
import jax.numpy as jnp
from jax.experimental import pallas as pl
from jax.experimental.pallas import tpu as pltpu


# ----------------------------------------------------------------------------
# Fused kernel: 3-NN inverse-distance interpolation + pointwise-conv MLP
# ----------------------------------------------------------------------------
def _fused_kernel(p1_ref, p2_ref, f1_ref, *rest, layer_ops):
    """rest = per-layer params (flattened) + o_ref.  All math f32, (C,N) layout.

    layer_ops: static tuple of (has_weight, relu).  A (False, relu) entry is a
    bias-only layer (its weight was hoisted across the interpolation).
    """
    o_ref = rest[-1]
    params = rest[:-1]

    p1 = p1_ref[0].astype(jnp.float32)           # (3, N1)  source points (native)
    p2 = p2_ref[0].astype(jnp.float32)           # (3, TQ)  query points (this tile)
    f1 = f1_ref[0].astype(jnp.float32)           # (Cf, N1) source features
    n1 = p1.shape[1]

    # Source coordinates as (N1, 1) columns: one tiny XLU transpose per tile.
    p1c = jnp.transpose(p1)                      # (N1, 3)

    # Squared distances (N1, TQ): pure VPU broadcast FMAs, exact and >= 0.
    d2 = (p1c[:, 0:1] - p2[0:1, :]) ** 2
    d2 = d2 + (p1c[:, 1:2] - p2[1:2, :]) ** 2
    d2 = d2 + (p1c[:, 2:3] - p2[2:3, :]) ** 2

    col = jax.lax.broadcasted_iota(jnp.int32, (n1, 1), 0)   # (N1, 1) column iota
    big = jnp.float32(3.0e38)

    # Unrolled 3-NN selection on squared distances.  Tie-break = lowest source
    # index (matches top_k).  sqrt / reciprocal only on the (1, TQ) minima.
    work = d2
    wacc = None          # (N1, TQ) unnormalized interpolation-weight matrix
    inv_sum = None       # (1, TQ)  sum of inverse distances
    for it in range(3):
        mval = jnp.min(work, axis=0, keepdims=True)                   # (1, TQ)
        hits = work == mval                                           # (N1, TQ)
        idx = jnp.min(jnp.where(hits, col, n1), axis=0, keepdims=True)
        sel = col == idx                                              # first hit only
        inv_d = pl.reciprocal(jnp.sqrt(mval) + 1e-10, approx=True)    # (1, TQ) EUP
        contrib = jnp.where(sel, inv_d, 0.0)
        wacc = contrib if wacc is None else wacc + contrib
        inv_sum = inv_d if inv_sum is None else inv_sum + inv_d
        if it < 2:                      # final re-mask is dead work -> skip
            work = jnp.where(sel, big, work)

    # Gather-as-matmul on the UNNORMALIZED weights; normalize the small
    # (Cf, TQ) result instead of the (N1, TQ) matrix.
    x = jnp.dot(f1, wacc, preferred_element_type=jnp.float32)         # (Cf, TQ)
    x = x * pl.reciprocal(inv_sum)                                    # (1, TQ) bcast

    # Pointwise-conv MLP (BatchNorm pre-folded): y = w @ x + b [+ ReLU].
    pi = 0
    for has_w, relu in layer_ops:
        if has_w:
            w = params[pi][...].astype(jnp.float32)                   # (Cout, Cin)
            b = params[pi + 1][...].astype(jnp.float32)               # (Cout, 1)
            pi += 2
            x = jnp.dot(w, x, preferred_element_type=jnp.float32) + b
        else:                                                         # hoisted layer
            b = params[pi][...].astype(jnp.float32)
            pi += 1
            x = x + b
        if relu:
            x = jnp.maximum(x, 0.0)

    o_ref[0] = x.astype(o_ref.dtype)                                  # (C_out, TQ)


# ----------------------------------------------------------------------------
# Tiling / VMEM budgeting (N1- and TPU-generation-aware)
# ----------------------------------------------------------------------------
def _round_up(x, m):
    return (x + m - 1) // m * m


def _vmem_capacity_bytes():
    try:
        cap = int(pltpu.get_tpu_info().vmem_capacity_bytes)
        if cap > 0:
            return cap
    except Exception:
        pass
    return 64 * 1024 * 1024        # conservative default (v7x per-TC VMEM)


def _choose_query_tile(n1, n2, batch, cap):
    # ~5 live f32 (N1, TQ) temporaries dominate the selection loop.
    temp_budget = min((cap * 3) // 8, 48 * 1024 * 1024)
    max_tq = temp_budget // (5 * 4 * max(_round_up(n1, 8), 8))
    n2_pad128 = _round_up(max(n2, 1), 128)
    tq = max(128, min(1024, (max_tq // 128) * 128, n2_pad128))
    # v7x has 2 TensorCores: keep >=2 grid steps along a parallel axis if B==1.
    if batch == 1 and n2_pad128 >= 2 * 128:
        tq = min(tq, max(128, ((n2_pad128 // 2) // 128) * 128))
    return tq


def _vmem_limit_bytes(n1, tq, cf, c_out, cap, single_buffer):
    n1p = _round_up(n1, 8)
    fbuf = 1 if single_buffer else 2
    est = 5 * 4 * n1p * tq                              # (N1, TQ) f32 temporaries
    est += fbuf * 4 * _round_up(cf, 8) * n1p            # resident feature block(s)
    est += fbuf * 4 * 8 * n1p                           # points1 block(s) (3->8 sublanes)
    est += 2 * 4 * 8 * tq                               # points2 blocks (double buffered)
    est += 2 * 4 * _round_up(c_out, 8) * tq             # output blocks
    est += 8 * 1024 * 1024                              # weights / activations / scratch
    return max(32 * 1024 * 1024, min(int(est * 1.5), (cap // 8) * 7))


# ----------------------------------------------------------------------------
# pallas_call wrapper
# ----------------------------------------------------------------------------
def fused_feature_propagation(points1, points2, features, kern_params, layer_ops):
    """points1: (B,3,N1); points2: (B,3,N2); features: (B,Cf,N1);
    kern_params: flattened per-layer params; layer_ops: ((has_w, relu), ...)."""
    B, _, N1 = points1.shape
    _, _, N2 = points2.shape
    Cf = features.shape[1]
    c_out = kern_params[-1].shape[0]                    # last bias is (C_out, 1)

    cap = _vmem_capacity_bytes()
    tq = _choose_query_tile(N1, N2, B, cap)
    n2_pad = _round_up(N2, tq)
    if n2_pad != N2:                                    # pad -> lane-dense 128-mult tiles
        points2 = jnp.pad(points2, ((0, 0), (0, 0), (0, n2_pad - N2)))
    grid = (B, n2_pad // tq)

    kern = functools.partial(_fused_kernel, layer_ops=tuple(layer_ops))

    def _build(single_buffer):
        resident = {"pipeline_mode": pl.Buffered(1)} if single_buffer else {}
        in_specs = [
            pl.BlockSpec((1, 3, N1), lambda b, q: (b, 0, 0), **resident),   # resident
            pl.BlockSpec((1, 3, tq), lambda b, q: (b, 0, q)),               # per tile
            pl.BlockSpec((1, Cf, N1), lambda b, q: (b, 0, 0), **resident),  # resident
        ]
        args = [points1, points2, features]
        for p in kern_params:
            in_specs.append(pl.BlockSpec(p.shape, lambda b, q: (0, 0), **resident))
            args.append(p)
        call = pl.pallas_call(
            kern,
            out_shape=jax.ShapeDtypeStruct((B, c_out, n2_pad), jnp.float32),
            grid=grid,
            in_specs=in_specs,
            out_specs=pl.BlockSpec((1, c_out, tq), lambda b, q: (b, 0, q)),
            compiler_params=pltpu.CompilerParams(
                dimension_semantics=("parallel", "parallel"),
                vmem_limit_bytes=_vmem_limit_bytes(N1, tq, Cf, c_out, cap,
                                                   single_buffer)),
        )
        return call, args

    try:
        call, args = _build(True)
        out = jax.block_until_ready(call(*args))
    except Exception:
        # Fallback to default double buffering if single-buffering is rejected.
        call, args = _build(False)
        out = jax.block_until_ready(call(*args))

    if n2_pad != N2:
        out = out[:, :, :N2]
    return out


# ----------------------------------------------------------------------------
# Parameter initialization (deterministic, synthetic) with BN folding
# ----------------------------------------------------------------------------
def init_feature_propagation_params(key, in_channels, out_channels, mlp):
    eps = 0.001
    params = []
    c_in = in_channels
    for c_out in mlp:
        key, k1, k2, k3, k4, k5, k6 = jax.random.split(key, 7)
        w = jax.random.normal(k1, (c_in, c_out), jnp.float32) * 0.1
        b = jax.random.normal(k2, (c_out,), jnp.float32) * 0.1
        gamma = 1.0 + 0.1 * jax.random.normal(k3, (c_out,), jnp.float32)
        beta = 0.1 * jax.random.normal(k4, (c_out,), jnp.float32)
        rmean = 0.1 * jax.random.normal(k5, (c_out,), jnp.float32)
        rvar = jnp.abs(jax.random.normal(k6, (c_out,), jnp.float32)) + 0.5
        scale = gamma / jnp.sqrt(rvar + eps)            # eval-mode BN -> affine
        shift = beta - rmean * scale
        params.append(dict(
            w=w, b=b, scale=scale, shift=shift, relu=True,
            w_folded=jnp.transpose(w * scale[None, :]),            # (Cout, Cin)
            b_folded=(b * scale + shift).reshape(c_out, 1)))       # (Cout, 1)
        c_in = c_out
    key, k1, k2 = jax.random.split(key, 3)
    w = jax.random.normal(k1, (c_in, out_channels), jnp.float32) * 0.1
    b = jax.random.normal(k2, (out_channels,), jnp.float32) * 0.1
    params.append(dict(
        w=w, b=b,
        scale=jnp.ones((out_channels,), jnp.float32),
        shift=jnp.zeros((out_channels,), jnp.float32),
        relu=False,
        w_folded=jnp.transpose(w),
        b_folded=b.reshape(out_channels, 1)))
    return params


# ----------------------------------------------------------------------------
# FeaturePropagation.forward equivalent
# ----------------------------------------------------------------------------
def feature_propagation_forward(params, points1, points2, features1, features2):
    # points1: (B,3,N1), points2: (B,3,N2), features1: (B,C1,N1) -- NCW like torch.
    # features2 is unused, matching the reference PyTorch forward exactly.
    del features2
    _, _, N1 = points1.shape
    assert N1 >= 3, "need at least 3 source points for 3-NN interpolation"

    ws = [lyr["w_folded"] for lyr in params]
    bs = [lyr["b_folded"] for lyr in params]
    relus = [bool(lyr["relu"]) for lyr in params]

    feats = features1
    layer_ops = []
    kern_params = []
    # Hoist the linear part of the first conv across the (linear) interpolation
    # when it shrinks the resident feature block (C1 > mlp[0]).  Exact rewrite.
    if ws[0].shape[0] < features1.shape[1]:
        feats = jnp.einsum('oc,bcn->bon', ws[0], features1)        # (B, mlp0, N1)
        layer_ops.append((False, relus[0]))                        # bias-only + relu
        kern_params.append(bs[0])
        ws, bs, relus = ws[1:], bs[1:], relus[1:]
    for w, b, r in zip(ws, bs, relus):
        layer_ops.append((True, r))
        kern_params.append(w)
        kern_params.append(b)

    return fused_feature_propagation(points1, points2, feats, kern_params, layer_ops)


# ----------------------------------------------------------------------------
# Pure-JAX reference (for correctness check)
# ----------------------------------------------------------------------------
def reference_forward(params, points1, points2, features1):
    p1_t = jnp.transpose(points1, (0, 2, 1))                  # (B, N1, 3)
    p2_t = jnp.transpose(points2, (0, 2, 1))                  # (B, N2, 3)
    f1_t = jnp.transpose(features1, (0, 2, 1))                # (B, N1, C1)
    d = jnp.sqrt(jnp.sum((p2_t[:, :, None, :] - p1_t[:, None, :, :]) ** 2,
                         axis=-1))                            # (B, N2, N1)
    neg_d, idx = jax.lax.top_k(-d, 3)
    dk = -neg_d
    inv = 1.0 / (dk + 1e-10)
    w = inv / jnp.sum(inv, -1, keepdims=True)                 # (B, N2, 3)
    gathered = jax.vmap(lambda f, i: f[i])(f1_t, idx)         # (B, N2, 3, C1)
    x = jnp.sum(gathered * w[..., None], axis=2)              # (B, N2, C1)
    for layer in params:
        y = jnp.einsum('bnc,cd->bnd', x, layer["w"]) + layer["b"]
        y = y * layer["scale"] + layer["shift"]
        x = jnp.maximum(y, 0.0) if layer["relu"] else y
    return jnp.transpose(x, (0, 2, 1))


if __name__ == "__main__":
    key = jax.random.PRNGKey(0)

    # ---- small-shape check (single query tile, no hoist) --------------------
    B, N1, N2 = 2, 24, 16
    C1, C2 = 8, 8
    in_channels, out_channels, mlp = C1, 16, [32, 32]
    k1, k2, k3, k4, kp, key = jax.random.split(key, 6)
    points1 = jax.random.normal(k1, (B, 3, N1), jnp.float32)
    points2 = jax.random.normal(k2, (B, 3, N2), jnp.float32)
    features1 = jax.random.normal(k3, (B, C1, N1), jnp.float32)
    features2 = jax.random.normal(k4, (B, C2, N2), jnp.float32)   # unused by forward
    params = init_feature_propagation_params(kp, in_channels, out_channels, mlp)

    out = feature_propagation_forward(params, points1, points2, features1, features2)
    out = jax.block_until_ready(out)
    assert out.shape == (B, out_channels, N2), out.shape
    ref = jax.block_until_ready(reference_forward(params, points1, points2, features1))
    err = float(jnp.max(jnp.abs(out - ref)))
    assert jnp.allclose(out, ref, rtol=2e-3, atol=2e-3), err

    # ---- tiled / padded / hoisted-first-layer check --------------------------
    B2, N1b, N2b = 1, 200, 300
    C1b, outb, mlpb = 64, 20, [32, 16]
    k1, k2, k3, kp, key = jax.random.split(key, 5)
    points1b = jax.random.normal(k1, (B2, 3, N1b), jnp.float32)
    points2b = jax.random.normal(k2, (B2, 3, N2b), jnp.float32)
    features1b = jax.random.normal(k3, (B2, C1b, N1b), jnp.float32)
    paramsb = init_feature_propagation_params(kp, C1b, outb, mlpb)

    out_b = feature_propagation_forward(paramsb, points1b, points2b, features1b, None)
    out_b = jax.block_until_ready(out_b)
    assert out_b.shape == (B2, outb, N2b), out_b.shape
    ref_b = jax.block_until_ready(reference_forward(paramsb, points1b, points2b,
                                                    features1b))
    err_b = float(jnp.max(jnp.abs(out_b - ref_b)))
    assert jnp.allclose(out_b, ref_b, rtol=2e-3, atol=2e-3), err_b

    print("KERNEL_OK")
</pallas_src>

<mosaic_0001>
module attributes {stable_mosaic.version = 11 : i64} {
  func.func @_fused_kernel(%arg0: i32, %arg1: i32, %arg2: memref<1x3x24xf32, #tpu.memory_space<vmem>>, %arg3: memref<1x3x128xf32, #tpu.memory_space<vmem>>, %arg4: memref<1x8x24xf32, #tpu.memory_space<vmem>>, %arg5: memref<32x8xf32, #tpu.memory_space<vmem>>, %arg6: memref<32x1xf32, #tpu.memory_space<vmem>>, %arg7: memref<32x32xf32, #tpu.memory_space<vmem>>, %arg8: memref<32x1xf32, #tpu.memory_space<vmem>>, %arg9: memref<16x32xf32, #tpu.memory_space<vmem>>, %arg10: memref<16x1xf32, #tpu.memory_space<vmem>>, %arg11: memref<1x16x128xf32, #tpu.memory_space<vmem>>) attributes {dimension_semantics = [#tpu.dimension_semantics<parallel>, #tpu.dimension_semantics<parallel>], iteration_bounds = array<i64: 2, 1>, scalar_prefetch = 0 : i64, scratch_operands = 0 : i64, tpu.core_type = #tpu.core_type<tc>, window_params = [{pipeline_mode = #tpu.pipeline_mode<synchronous>, transform_indices = @transform_0, window_bounds = array<i64: 1, 3, 24>}, {transform_indices = @transform_1, window_bounds = array<i64: 1, 3, 128>}, {pipeline_mode = #tpu.pipeline_mode<synchronous>, transform_indices = @transform_2, window_bounds = array<i64: 1, 8, 24>}, {pipeline_mode = #tpu.pipeline_mode<synchronous>, transform_indices = @transform_3, window_bounds = array<i64: 32, 8>}, {pipeline_mode = #tpu.pipeline_mode<synchronous>, transform_indices = @transform_4, window_bounds = array<i64: 32, 1>}, {pipeline_mode = #tpu.pipeline_mode<synchronous>, transform_indices = @transform_5, window_bounds = array<i64: 32, 32>}, {pipeline_mode = #tpu.pipeline_mode<synchronous>, transform_indices = @transform_6, window_bounds = array<i64: 32, 1>}, {pipeline_mode = #tpu.pipeline_mode<synchronous>, transform_indices = @transform_7, window_bounds = array<i64: 16, 32>}, {pipeline_mode = #tpu.pipeline_mode<synchronous>, transform_indices = @transform_8, window_bounds = array<i64: 16, 1>}, {transform_indices = @transform_9, window_bounds = array<i64: 1, 16, 128>}]} {
    %c0 = arith.constant 0 : index
    %c0_0 = arith.constant 0 : index
    %c0_1 = arith.constant 0 : index
    %0 = vector.load %arg2[%c0, %c0_0, %c0_1] : memref<1x3x24xf32, #tpu.memory_space<vmem>>, vector<1x3x24xf32>
    %1 = vector.shape_cast %0 : vector<1x3x24xf32> to vector<3x24xf32>
    %c0_2 = arith.constant 0 : index
    %c0_3 = arith.constant 0 : index
    %c0_4 = arith.constant 0 : index
    %2 = vector.load %arg3[%c0_2, %c0_3, %c0_4] : memref<1x3x128xf32, #tpu.memory_space<vmem>>, vector<1x3x128xf32>
    %3 = vector.shape_cast %2 : vector<1x3x128xf32> to vector<3x128xf32>
    %c0_5 = arith.constant 0 : index
    %c0_6 = arith.constant 0 : index
    %c0_7 = arith.constant 0 : index
    %4 = vector.load %arg4[%c0_5, %c0_6, %c0_7] : memref<1x8x24xf32, #tpu.memory_space<vmem>>, vector<1x8x24xf32>
    %5 = vector.shape_cast %4 : vector<1x8x24xf32> to vector<8x24xf32>
    %6 = tpu.transpose %1, [1, 0] : vector<3x24xf32> -> vector<24x3xf32>
    %7 = vector.extract_strided_slice %6 {offsets = [0, 0], sizes = [24, 1], strides = [1, 1]} : vector<24x3xf32> to vector<24x1xf32>
    %8 = vector.extract_strided_slice %3 {offsets = [0, 0], sizes = [1, 128], strides = [1, 1]} : vector<3x128xf32> to vector<1x128xf32>
    %9 = vector.broadcast %7 : vector<24x1xf32> to vector<24x128xf32>
    %10 = vector.broadcast %8 : vector<1x128xf32> to vector<24x128xf32>
    %11 = arith.subf %9, %10 : vector<24x128xf32>
    %12 = arith.mulf %11, %11 : vector<24x128xf32>
    %13 = vector.extract_strided_slice %6 {offsets = [0, 1], sizes = [24, 1], strides = [1, 1]} : vector<24x3xf32> to vector<24x1xf32>
    %14 = vector.extract_strided_slice %3 {offsets = [1, 0], sizes = [1, 128], strides = [1, 1]} : vector<3x128xf32> to vector<1x128xf32>
    %15 = vector.broadcast %13 : vector<24x1xf32> to vector<24x128xf32>
    %16 = vector.broadcast %14 : vector<1x128xf32> to vector<24x128xf32>
    %17 = arith.subf %15, %16 : vector<24x128xf32>
    %18 = arith.mulf %17, %17 : vector<24x128xf32>
    %19 = arith.addf %12, %18 : vector<24x128xf32>
    %20 = vector.extract_strided_slice %6 {offsets = [0, 2], sizes = [24, 1], strides = [1, 1]} : vector<24x3xf32> to vector<24x1xf32>
    %21 = vector.extract_strided_slice %3 {offsets = [2, 0], sizes = [1, 128], strides = [1, 1]} : vector<3x128xf32> to vector<1x128xf32>
    %22 = vector.broadcast %20 : vector<24x1xf32> to vector<24x128xf32>
    %23 = vector.broadcast %21 : vector<1x128xf32> to vector<24x128xf32>
    %24 = arith.subf %22, %23 : vector<24x128xf32>
    %25 = arith.mulf %24, %24 : vector<24x128xf32>
    %26 = arith.addf %19, %25 : vector<24x128xf32>
    %27 = tpu.iota {dimensions = array<i32: 0>} : vector<24x1xi32>
    %cst = arith.constant dense<0x7F800000> : vector<128xf32>
    %28 = vector.multi_reduction <minimumf>, %26, %cst [0] : vector<24x128xf32> to vector<128xf32>
    %29 = vector.shape_cast %28 : vector<128xf32> to vector<1x128xf32>
    %30 = vector.broadcast %29 : vector<1x128xf32> to vector<24x128xf32>
    %31 = arith.cmpf oeq, %26, %30 : vector<24x128xf32>
    %c24_i32 = arith.constant 24 : i32
    %32 = vector.shape_cast %27 : vector<24x1xi32> to vector<24x1xi32>
    %33 = vector.broadcast %32 : vector<24x1xi32> to vector<24x128xi32>
    %34 = vector.broadcast %c24_i32 : i32 to vector<24x128xi32>
    %35 = arith.select %31, %33, %34 : vector<24x128xi1>, vector<24x128xi32>
    %cst_8 = arith.constant dense<2147483647> : vector<128xi32>
    %36 = vector.multi_reduction <minsi>, %35, %cst_8 [0] : vector<24x128xi32> to vector<128xi32>
    %37 = vector.shape_cast %36 : vector<128xi32> to vector<1x128xi32>
    %38 = vector.broadcast %27 : vector<24x1xi32> to vector<24x128xi32>
    %39 = vector.broadcast %37 : vector<1x128xi32> to vector<24x128xi32>
    %40 = arith.cmpi eq, %38, %39 : vector<24x128xi32>
    %41 = math.sqrt %29 : vector<1x128xf32>
    %cst_9 = arith.constant 1.000000e-10 : f32
    %42 = vector.broadcast %cst_9 : f32 to vector<1x128xf32>
    %43 = arith.addf %41, %42 : vector<1x128xf32>
    %44 = tpu.reciprocal %43 {approx = true} : vector<1x128xf32> -> vector<1x128xf32>
    %cst_10 = arith.constant 0.000000e+00 : f32
    %45 = vector.shape_cast %44 : vector<1x128xf32> to vector<1x128xf32>
    %46 = vector.broadcast %45 : vector<1x128xf32> to vector<24x128xf32>
    %47 = vector.broadcast %cst_10 : f32 to vector<24x128xf32>
    %48 = arith.select %40, %46, %47 : vector<24x128xi1>, vector<24x128xf32>
    %cst_11 = arith.constant 3.000000e+38 : f32
    %49 = vector.broadcast %cst_11 : f32 to vector<24x128xf32>
    %50 = arith.select %40, %49, %26 : vector<24x128xi1>, vector<24x128xf32>
    %cst_12 = arith.constant dense<0x7F800000> : vector<128xf32>
    %51 = vector.multi_reduction <minimumf>, %50, %cst_12 [0] : vector<24x128xf32> to vector<128xf32>
    %52 = vector.shape_cast %51 : vector<128xf32> to vector<1x128xf32>
    %53 = vector.broadcast %52 : vector<1x128xf32> to vector<24x128xf32>
    %54 = arith.cmpf oeq, %50, %53 : vector<24x128xf32>
    %c24_i32_13 = arith.constant 24 : i32
    %55 = vector.shape_cast %27 : vector<24x1xi32> to vector<24x1xi32>
    %56 = vector.broadcast %55 : vector<24x1xi32> to vector<24x128xi32>
    %57 = vector.broadcast %c24_i32_13 : i32 to vector<24x128xi32>
    %58 = arith.select %54, %56, %57 : vector<24x128xi1>, vector<24x128xi32>
    %cst_14 = arith.constant dense<2147483647> : vector<128xi32>
    %59 = vector.multi_reduction <minsi>, %58, %cst_14 [0] : vector<24x128xi32> to vector<128xi32>
    %60 = vector.shape_cast %59 : vector<128xi32> to vector<1x128xi32>
    %61 = vector.broadcast %27 : vector<24x1xi32> to vector<24x128xi32>
    %62 = vector.broadcast %60 : vector<1x128xi32> to vector<24x128xi32>
    %63 = arith.cmpi eq, %61, %62 : vector<24x128xi32>
    %64 = math.sqrt %52 : vector<1x128xf32>
    %cst_15 = arith.constant 1.000000e-10 : f32
    %65 = vector.broadcast %cst_15 : f32 to vector<1x128xf32>
    %66 = arith.addf %64, %65 : vector<1x128xf32>
    %67 = tpu.reciprocal %66 {approx = true} : vector<1x128xf32> -> vector<1x128xf32>
    %cst_16 = arith.constant 0.000000e+00 : f32
    %68 = vector.shape_cast %67 : vector<1x128xf32> to vector<1x128xf32>
    %69 = vector.broadcast %68 : vector<1x128xf32> to vector<24x128xf32>
    %70 = vector.broadcast %cst_16 : f32 to vector<24x128xf32>
    %71 = arith.select %63, %69, %70 : vector<24x128xi1>, vector<24x128xf32>
    %72 = arith.addf %48, %71 : vector<24x128xf32>
    %73 = arith.addf %44, %67 : vector<1x128xf32>
    %cst_17 = arith.constant 3.000000e+38 : f32
    %74 = vector.broadcast %cst_17 : f32 to vector<24x128xf32>
    %75 = arith.select %63, %74, %50 : vector<24x128xi1>, vector<24x128xf32>
    %cst_18 = arith.constant dense<0x7F800000> : vector<128xf32>
    %76 = vector.multi_reduction <minimumf>, %75, %cst_18 [0] : vector<24x128xf32> to vector<128xf32>
    %77 = vector.shape_cast %76 : vector<128xf32> to vector<1x128xf32>
    %78 = vector.broadcast %77 : vector<1x128xf32> to vector<24x128xf32>
    %79 = arith.cmpf oeq, %75, %78 : vector<24x128xf32>
    %c24_i32_19 = arith.constant 24 : i32
    %80 = vector.shape_cast %27 : vector<24x1xi32> to vector<24x1xi32>
    %81 = vector.broadcast %80 : vector<24x1xi32> to vector<24x128xi32>
    %82 = vector.broadcast %c24_i32_19 : i32 to vector<24x128xi32>
    %83 = arith.select %79, %81, %82 : vector<24x128xi1>, vector<24x128xi32>
    %cst_20 = arith.constant dense<2147483647> : vector<128xi32>
    %84 = vector.multi_reduction <minsi>, %83, %cst_20 [0] : vector<24x128xi32> to vector<128xi32>
    %85 = vector.shape_cast %84 : vector<128xi32> to vector<1x128xi32>
    %86 = vector.broadcast %27 : vector<24x1xi32> to vector<24x128xi32>
    %87 = vector.broadcast %85 : vector<1x128xi32> to vector<24x128xi32>
    %88 = arith.cmpi eq, %86, %87 : vector<24x128xi32>
    %89 = math.sqrt %77 : vector<1x128xf32>
    %cst_21 = arith.constant 1.000000e-10 : f32
    %90 = vector.broadcast %cst_21 : f32 to vector<1x128xf32>
    %91 = arith.addf %89, %90 : vector<1x128xf32>
    %92 = tpu.reciprocal %91 {approx = true} : vector<1x128xf32> -> vector<1x128xf32>
    %cst_22 = arith.constant 0.000000e+00 : f32
    %93 = vector.shape_cast %92 : vector<1x128xf32> to vector<1x128xf32>
    %94 = vector.broadcast %93 : vector<1x128xf32> to vector<24x128xf32>
    %95 = vector.broadcast %cst_22 : f32 to vector<24x128xf32>
    %96 = arith.select %88, %94, %95 : vector<24x128xi1>, vector<24x128xf32>
    %97 = arith.addf %72, %96 : vector<24x128xf32>
    %98 = arith.addf %73, %92 : vector<1x128xf32>
    %cst_23 = arith.constant dense<0.000000e+00> : vector<8x128xf32>
    %99 = tpu.matmul %5, %97, %cst_23 {dimension_numbers = #tpu.dot_dimension_numbers<[1], [0], [0], [1], [0, 0, 1, 1], [], []>} : vector<8x24xf32>, vector<24x128xf32>, vector<8x128xf32> -> vector<8x128xf32>
    %100 = tpu.reciprocal %98 : vector<1x128xf32> -> vector<1x128xf32>
    %101 = vector.broadcast %100 : vector<1x128xf32> to vector<8x128xf32>
    %102 = arith.mulf %99, %101 : vector<8x128xf32>
    %c0_24 = arith.constant 0 : index
    %c0_25 = arith.constant 0 : index
    %103 = vector.load %arg5[%c0_24, %c0_25] : memref<32x8xf32, #tpu.memory_space<vmem>>, vector<32x8xf32>
    %c0_26 = arith.constant 0 : index
    %c0_27 = arith.constant 0 : index
    %104 = vector.load %arg6[%c0_26, %c0_27] : memref<32x1xf32, #tpu.memory_space<vmem>>, vector<32x1xf32>
    %cst_28 = arith.constant dense<0.000000e+00> : vector<32x128xf32>
    %105 = tpu.matmul %103, %102, %cst_28 {dimension_numbers = #tpu.dot_dimension_numbers<[1], [0], [0], [1], [0, 0, 1, 1], [], []>} : vector<32x8xf32>, vector<8x128xf32>, vector<32x128xf32> -> vector<32x128xf32>
    %106 = vector.broadcast %104 : vector<32x1xf32> to vector<32x128xf32>
    %107 = arith.addf %105, %106 : vector<32x128xf32>
    %cst_29 = arith.constant 0.000000e+00 : f32
    %108 = vector.broadcast %cst_29 : f32 to vector<32x128xf32>
    %109 = arith.maximumf %107, %108 : vector<32x128xf32>
    %c0_30 = arith.constant 0 : index
    %c0_31 = arith.constant 0 : index
    %110 = vector.load %arg7[%c0_30, %c0_31] : memref<32x32xf32, #tpu.memory_space<vmem>>, vector<32x32xf32>
    %c0_32 = arith.constant 0 : index
    %c0_33 = arith.constant 0 : index
    %111 = vector.load %arg8[%c0_32, %c0_33] : memref<32x1xf32, #tpu.memory_space<vmem>>, vector<32x1xf32>
    %cst_34 = arith.constant dense<0.000000e+00> : vector<32x128xf32>
    %112 = tpu.matmul %110, %109, %cst_34 {dimension_numbers = #tpu.dot_dimension_numbers<[1], [0], [0], [1], [0, 0, 1, 1], [], []>} : vector<32x32xf32>, vector<32x128xf32>, vector<32x128xf32> -> vector<32x128xf32>
    %113 = vector.broadcast %111 : vector<32x1xf32> to vector<32x128xf32>
    %114 = arith.addf %112, %113 : vector<32x128xf32>
    %cst_35 = arith.constant 0.000000e+00 : f32
    %115 = vector.broadcast %cst_35 : f32 to vector<32x128xf32>
    %116 = arith.maximumf %114, %115 : vector<32x128xf32>
    %c0_36 = arith.constant 0 : index
    %c0_37 = arith.constant 0 : index
    %117 = vector.load %arg9[%c0_36, %c0_37] : memref<16x32xf32, #tpu.memory_space<vmem>>, vector<16x32xf32>
    %c0_38 = arith.constant 0 : index
    %c0_39 = arith.constant 0 : index
    %118 = vector.load %arg10[%c0_38, %c0_39] : memref<16x1xf32, #tpu.memory_space<vmem>>, vector<16x1xf32>
    %cst_40 = arith.constant dense<0.000000e+00> : vector<16x128xf32>
    %119 = tpu.matmul %117, %116, %cst_40 {dimension_numbers = #tpu.dot_dimension_numbers<[1], [0], [0], [1], [0, 0, 1, 1], [], []>} : vector<16x32xf32>, vector<32x128xf32>, vector<16x128xf32> -> vector<16x128xf32>
    %120 = vector.broadcast %118 : vector<16x1xf32> to vector<16x128xf32>
    %121 = arith.addf %119, %120 : vector<16x128xf32>
    %c0_41 = arith.constant 0 : index
    %c0_42 = arith.constant 0 : index
    %c0_43 = arith.constant 0 : index
    %122 = vector.load %arg11[%c0_41, %c0_42, %c0_43] : memref<1x16x128xf32, #tpu.memory_space<vmem>>, vector<1x16x128xf32>
    %123 = vector.shape_cast %122 : vector<1x16x128xf32> to vector<16x128xf32>
    %124 = vector.shape_cast %121 : vector<16x128xf32> to vector<1x16x128xf32>
    tpu.vector_store %arg11[%c0_41, %c0_42, %c0_43], %124 {strides = array<i32>} : memref<1x16x128xf32, #tpu.memory_space<vmem>>, vector<1x16x128xf32>,
    return
  }
  func.func @transform_0(%arg0: i32, %arg1: i32) -> (i32, i32, i32) {
    %c0_i32 = arith.constant 0 : i32
    %c0_i32_0 = arith.constant 0 : i32
    %c0_i32_1 = arith.constant 0 : i32
    return %arg0, %c0_i32, %c0_i32_0 : i32, i32, i32
  }
  func.func @transform_1(%arg0: i32, %arg1: i32) -> (i32, i32, i32) {
    %c0_i32 = arith.constant 0 : i32
    %c0_i32_0 = arith.constant 0 : i32
    return %arg0, %c0_i32, %arg1 : i32, i32, i32
  }
  func.func @transform_2(%arg0: i32, %arg1: i32) -> (i32, i32, i32) {
    %c0_i32 = arith.constant 0 : i32
    %c0_i32_0 = arith.constant 0 : i32
    %c0_i32_1 = arith.constant 0 : i32
    return %arg0, %c0_i32, %c0_i32_0 : i32, i32, i32
  }
  func.func @transform_3(%arg0: i32, %arg1: i32) -> (i32, i32) {
    %c0_i32 = arith.constant 0 : i32
    %c0_i32_0 = arith.constant 0 : i32
    %c0_i32_1 = arith.constant 0 : i32
    return %c0_i32, %c0_i32_0 : i32, i32
  }
  func.func @transform_4(%arg0: i32, %arg1: i32) -> (i32, i32) {
    %c0_i32 = arith.constant 0 : i32
    %c0_i32_0 = arith.constant 0 : i32
    %c0_i32_1 = arith.constant 0 : i32
    return %c0_i32, %c0_i32_0 : i32, i32
  }
  func.func @transform_5(%arg0: i32, %arg1: i32) -> (i32, i32) {
    %c0_i32 = arith.constant 0 : i32
    %c0_i32_0 = arith.constant 0 : i32
    %c0_i32_1 = arith.constant 0 : i32
    return %c0_i32, %c0_i32_0 : i32, i32
  }
  func.func @transform_6(%arg0: i32, %arg1: i32) -> (i32, i32) {
    %c0_i32 = arith.constant 0 : i32
    %c0_i32_0 = arith.constant 0 : i32
    %c0_i32_1 = arith.constant 0 : i32
    return %c0_i32, %c0_i32_0 : i32, i32
  }
  func.func @transform_7(%arg0: i32, %arg1: i32) -> (i32, i32) {
    %c0_i32 = arith.constant 0 : i32
    %c0_i32_0 = arith.constant 0 : i32
    %c0_i32_1 = arith.constant 0 : i32
    return %c0_i32, %c0_i32_0 : i32, i32
  }
  func.func @transform_8(%arg0: i32, %arg1: i32) -> (i32, i32) {
    %c0_i32 = arith.constant 0 : i32
    %c0_i32_0 = arith.constant 0 : i32
    %c0_i32_1 = arith.constant 0 : i32
    return %c0_i32, %c0_i32_0 : i32, i32
  }
  func.func @transform_9(%arg0: i32, %arg1: i32) -> (i32, i32, i32) {
    %c0_i32 = arith.constant 0 : i32
    %c0_i32_0 = arith.constant 0 : i32
    return %arg0, %c0_i32, %arg1 : i32, i32, i32
  }
}

module attributes {stable_mosaic.version = 11 : i64} {
  func.func @_fused_kernel(%arg0: i32, %arg1: i32, %arg2: memref<1x3x24xf32, #tpu.memory_space<vmem>>, %arg3: memref<1x3x128xf32, #tpu.memory_space<vmem>>, %arg4: memref<1x8x24xf32, #tpu.memory_space<vmem>>, %arg5: memref<32x8xf32, #tpu.memory_space<vmem>>, %arg6: memref<32x1xf32, #tpu.memory_space<vmem>>, %arg7: memref<32x32xf32, #tpu.memory_space<vmem>>, %arg8: memref<32x1xf32, #tpu.memory_space<vmem>>, %arg9: memref<16x32xf32, #tpu.memory_space<vmem>>, %arg10: memref<16x1xf32, #tpu.memory_space<vmem>>, %arg11: memref<1x16x128xf32, #tpu.memory_space<vmem>>) attributes {dimension_semantics = [#tpu.dimension_semantics<parallel>, #tpu.dimension_semantics<parallel>], iteration_bounds = array<i64: 2, 1>, scalar_prefetch = 0 : i64, scratch_operands = 0 : i64, tpu.core_type = #tpu.core_type<tc>, window_params = [{transform_indices = @transform_0, window_bounds = array<i64: 1, 3, 24>}, {transform_indices = @transform_1, window_bounds = array<i64: 1, 3, 128>}, {transform_indices = @transform_2, window_bounds = array<i64: 1, 8, 24>}, {pipeline_mode = #tpu.pipeline_mode<synchronous>, transform_indices = @transform_3, window_bounds = array<i64: 32, 8>}, {pipeline_mode = #tpu.pipeline_mode<synchronous>, transform_indices = @transform_4, window_bounds = array<i64: 32, 1>}, {pipeline_mode = #tpu.pipeline_mode<synchronous>, transform_indices = @transform_5, window_bounds = array<i64: 32, 32>}, {pipeline_mode = #tpu.pipeline_mode<synchronous>, transform_indices = @transform_6, window_bounds = array<i64: 32, 1>}, {pipeline_mode = #tpu.pipeline_mode<synchronous>, transform_indices = @transform_7, window_bounds = array<i64: 16, 32>}, {pipeline_mode = #tpu.pipeline_mode<synchronous>, transform_indices = @transform_8, window_bounds = array<i64: 16, 1>}, {transform_indices = @transform_9, window_bounds = array<i64: 1, 16, 128>}]} {
    %c0 = arith.constant 0 : index
    %c0_0 = arith.constant 0 : index
    %c0_1 = arith.constant 0 : index
    %0 = vector.load %arg2[%c0, %c0_0, %c0_1] : memref<1x3x24xf32, #tpu.memory_space<vmem>>, vector<1x3x24xf32>
    %1 = vector.shape_cast %0 : vector<1x3x24xf32> to vector<3x24xf32>
    %c0_2 = arith.constant 0 : index
    %c0_3 = arith.constant 0 : index
    %c0_4 = arith.constant 0 : index
    %2 = vector.load %arg3[%c0_2, %c0_3, %c0_4] : memref<1x3x128xf32, #tpu.memory_space<vmem>>, vector<1x3x128xf32>
    %3 = vector.shape_cast %2 : vector<1x3x128xf32> to vector<3x128xf32>
    %c0_5 = arith.constant 0 : index
    %c0_6 = arith.constant 0 : index
    %c0_7 = arith.constant 0 : index
    %4 = vector.load %arg4[%c0_5, %c0_6, %c0_7] : memref<1x8x24xf32, #tpu.memory_space<vmem>>, vector<1x8x24xf32>
    %5 = vector.shape_cast %4 : vector<1x8x24xf32> to vector<8x24xf32>
    %6 = tpu.transpose %1, [1, 0] : vector<3x24xf32> -> vector<24x3xf32>
    %7 = vector.extract_strided_slice %6 {offsets = [0, 0], sizes = [24, 1], strides = [1, 1]} : vector<24x3xf32> to vector<24x1xf32>
    %8 = vector.extract_strided_slice %3 {offsets = [0, 0], sizes = [1, 128], strides = [1, 1]} : vector<3x128xf32> to vector<1x128xf32>
    %9 = vector.broadcast %7 : vector<24x1xf32> to vector<24x128xf32>
    %10 = vector.broadcast %8 : vector<1x128xf32> to vector<24x128xf32>
    %11 = arith.subf %9, %10 : vector<24x128xf32>
    %12 = arith.mulf %11, %11 : vector<24x128xf32>
    %13 = vector.extract_strided_slice %6 {offsets = [0, 1], sizes = [24, 1], strides = [1, 1]} : vector<24x3xf32> to vector<24x1xf32>
    %14 = vector.extract_strided_slice %3 {offsets = [1, 0], sizes = [1, 128], strides = [1, 1]} : vector<3x128xf32> to vector<1x128xf32>
    %15 = vector.broadcast %13 : vector<24x1xf32> to vector<24x128xf32>
    %16 = vector.broadcast %14 : vector<1x128xf32> to vector<24x128xf32>
    %17 = arith.subf %15, %16 : vector<24x128xf32>
    %18 = arith.mulf %17, %17 : vector<24x128xf32>
    %19 = arith.addf %12, %18 : vector<24x128xf32>
    %20 = vector.extract_strided_slice %6 {offsets = [0, 2], sizes = [24, 1], strides = [1, 1]} : vector<24x3xf32> to vector<24x1xf32>
    %21 = vector.extract_strided_slice %3 {offsets = [2, 0], sizes = [1, 128], strides = [1, 1]} : vector<3x128xf32> to vector<1x128xf32>
    %22 = vector.broadcast %20 : vector<24x1xf32> to vector<24x128xf32>
    %23 = vector.broadcast %21 : vector<1x128xf32> to vector<24x128xf32>
    %24 = arith.subf %22, %23 : vector<24x128xf32>
    %25 = arith.mulf %24, %24 : vector<24x128xf32>
    %26 = arith.addf %19, %25 : vector<24x128xf32>
    %27 = tpu.iota {dimensions = array<i32: 0>} : vector<24x1xi32>
    %cst = arith.constant dense<0x7F800000> : vector<128xf32>
    %28 = vector.multi_reduction <minimumf>, %26, %cst [0] : vector<24x128xf32> to vector<128xf32>
    %29 = vector.shape_cast %28 : vector<128xf32> to vector<1x128xf32>
    %30 = vector.broadcast %29 : vector<1x128xf32> to vector<24x128xf32>
    %31 = arith.cmpf oeq, %26, %30 : vector<24x128xf32>
    %c24_i32 = arith.constant 24 : i32
    %32 = vector.shape_cast %27 : vector<24x1xi32> to vector<24x1xi32>
    %33 = vector.broadcast %32 : vector<24x1xi32> to vector<24x128xi32>
    %34 = vector.broadcast %c24_i32 : i32 to vector<24x128xi32>
    %35 = arith.select %31, %33, %34 : vector<24x128xi1>, vector<24x128xi32>
    %cst_8 = arith.constant dense<2147483647> : vector<128xi32>
    %36 = vector.multi_reduction <minsi>, %35, %cst_8 [0] : vector<24x128xi32> to vector<128xi32>
    %37 = vector.shape_cast %36 : vector<128xi32> to vector<1x128xi32>
    %38 = vector.broadcast %27 : vector<24x1xi32> to vector<24x128xi32>
    %39 = vector.broadcast %37 : vector<1x128xi32> to vector<24x128xi32>
    %40 = arith.cmpi eq, %38, %39 : vector<24x128xi32>
    %41 = math.sqrt %29 : vector<1x128xf32>
    %cst_9 = arith.constant 1.000000e-10 : f32
    %42 = vector.broadcast %cst_9 : f32 to vector<1x128xf32>
    %43 = arith.addf %41, %42 : vector<1x128xf32>
    %44 = tpu.reciprocal %43 {approx = true} : vector<1x128xf32> -> vector<1x128xf32>
    %cst_10 = arith.constant 0.000000e+00 : f32
    %45 = vector.shape_cast %44 : vector<1x128xf32> to vector<1x128xf32>
    %46 = vector.broadcast %45 : vector<1x128xf32> to vector<24x128xf32>
    %47 = vector.broadcast %cst_10 : f32 to vector<24x128xf32>
    %48 = arith.select %40, %46, %47 : vector<24x128xi1>, vector<24x128xf32>
    %cst_11 = arith.constant 3.000000e+38 : f32
    %49 = vector.broadcast %cst_11 : f32 to vector<24x128xf32>
    %50 = arith.select %40, %49, %26 : vector<24x128xi1>, vector<24x128xf32>
    %cst_12 = arith.constant dense<0x7F800000> : vector<128xf32>
    %51 = vector.multi_reduction <minimumf>, %50, %cst_12 [0] : vector<24x128xf32> to vector<128xf32>
    %52 = vector.shape_cast %51 : vector<128xf32> to vector<1x128xf32>
    %53 = vector.broadcast %52 : vector<1x128xf32> to vector<24x128xf32>
    %54 = arith.cmpf oeq, %50, %53 : vector<24x128xf32>
    %c24_i32_13 = arith.constant 24 : i32
    %55 = vector.shape_cast %27 : vector<24x1xi32> to vector<24x1xi32>
    %56 = vector.broadcast %55 : vector<24x1xi32> to vector<24x128xi32>
    %57 = vector.broadcast %c24_i32_13 : i32 to vector<24x128xi32>
    %58 = arith.select %54, %56, %57 : vector<24x128xi1>, vector<24x128xi32>
    %cst_14 = arith.constant dense<2147483647> : vector<128xi32>
    %59 = vector.multi_reduction <minsi>, %58, %cst_14 [0] : vector<24x128xi32> to vector<128xi32>
    %60 = vector.shape_cast %59 : vector<128xi32> to vector<1x128xi32>
    %61 = vector.broadcast %27 : vector<24x1xi32> to vector<24x128xi32>
    %62 = vector.broadcast %60 : vector<1x128xi32> to vector<24x128xi32>
    %63 = arith.cmpi eq, %61, %62 : vector<24x128xi32>
    %64 = math.sqrt %52 : vector<1x128xf32>
    %cst_15 = arith.constant 1.000000e-10 : f32
    %65 = vector.broadcast %cst_15 : f32 to vector<1x128xf32>
    %66 = arith.addf %64, %65 : vector<1x128xf32>
    %67 = tpu.reciprocal %66 {approx = true} : vector<1x128xf32> -> vector<1x128xf32>
    %cst_16 = arith.constant 0.000000e+00 : f32
    %68 = vector.shape_cast %67 : vector<1x128xf32> to vector<1x128xf32>
    %69 = vector.broadcast %68 : vector<1x128xf32> to vector<24x128xf32>
    %70 = vector.broadcast %cst_16 : f32 to vector<24x128xf32>
    %71 = arith.select %63, %69, %70 : vector<24x128xi1>, vector<24x128xf32>
    %72 = arith.addf %48, %71 : vector<24x128xf32>
    %73 = arith.addf %44, %67 : vector<1x128xf32>
    %cst_17 = arith.constant 3.000000e+38 : f32
    %74 = vector.broadcast %cst_17 : f32 to vector<24x128xf32>
    %75 = arith.select %63, %74, %50 : vector<24x128xi1>, vector<24x128xf32>
    %cst_18 = arith.constant dense<0x7F800000> : vector<128xf32>
    %76 = vector.multi_reduction <minimumf>, %75, %cst_18 [0] : vector<24x128xf32> to vector<128xf32>
    %77 = vector.shape_cast %76 : vector<128xf32> to vector<1x128xf32>
    %78 = vector.broadcast %77 : vector<1x128xf32> to vector<24x128xf32>
    %79 = arith.cmpf oeq, %75, %78 : vector<24x128xf32>
    %c24_i32_19 = arith.constant 24 : i32
    %80 = vector.shape_cast %27 : vector<24x1xi32> to vector<24x1xi32>
    %81 = vector.broadcast %80 : vector<24x1xi32> to vector<24x128xi32>
    %82 = vector.broadcast %c24_i32_19 : i32 to vector<24x128xi32>
    %83 = arith.select %79, %81, %82 : vector<24x128xi1>, vector<24x128xi32>
    %cst_20 = arith.constant dense<2147483647> : vector<128xi32>
    %84 = vector.multi_reduction <minsi>, %83, %cst_20 [0] : vector<24x128xi32> to vector<128xi32>
    %85 = vector.shape_cast %84 : vector<128xi32> to vector<1x128xi32>
    %86 = vector.broadcast %27 : vector<24x1xi32> to vector<24x128xi32>
    %87 = vector.broadcast %85 : vector<1x128xi32> to vector<24x128xi32>
    %88 = arith.cmpi eq, %86, %87 : vector<24x128xi32>
    %89 = math.sqrt %77 : vector<1x128xf32>
    %cst_21 = arith.constant 1.000000e-10 : f32
    %90 = vector.broadcast %cst_21 : f32 to vector<1x128xf32>
    %91 = arith.addf %89, %90 : vector<1x128xf32>
    %92 = tpu.reciprocal %91 {approx = true} : vector<1x128xf32> -> vector<1x128xf32>
    %cst_22 = arith.constant 0.000000e+00 : f32
    %93 = vector.shape_cast %92 : vector<1x128xf32> to vector<1x128xf32>
    %94 = vector.broadcast %93 : vector<1x128xf32> to vector<24x128xf32>
    %95 = vector.broadcast %cst_22 : f32 to vector<24x128xf32>
    %96 = arith.select %88, %94, %95 : vector<24x128xi1>, vector<24x128xf32>
    %97 = arith.addf %72, %96 : vector<24x128xf32>
    %98 = arith.addf %73, %92 : vector<1x128xf32>
    %cst_23 = arith.constant dense<0.000000e+00> : vector<8x128xf32>
    %99 = tpu.matmul %5, %97, %cst_23 {dimension_numbers = #tpu.dot_dimension_numbers<[1], [0], [0], [1], [0, 0, 1, 1], [], []>} : vector<8x24xf32>, vector<24x128xf32>, vector<8x128xf32> -> vector<8x128xf32>
    %100 = tpu.reciprocal %98 : vector<1x128xf32> -> vector<1x128xf32>
    %101 = vector.broadcast %100 : vector<1x128xf32> to vector<8x128xf32>
    %102 = arith.mulf %99, %101 : vector<8x128xf32>
    %c0_24 = arith.constant 0 : index
    %c0_25 = arith.constant 0 : index
    %103 = vector.load %arg5[%c0_24, %c0_25] : memref<32x8xf32, #tpu.memory_space<vmem>>, vector<32x8xf32>
    %c0_26 = arith.constant 0 : index
    %c0_27 = arith.constant 0 : index
    %104 = vector.load %arg6[%c0_26, %c0_27] : memref<32x1xf32, #tpu.memory_space<vmem>>, vector<32x1xf32>
    %cst_28 = arith.constant dense<0.000000e+00> : vector<32x128xf32>
    %105 = tpu.matmul %103, %102, %cst_28 {dimension_numbers = #tpu.dot_dimension_numbers<[1], [0], [0], [1], [0, 0, 1, 1], [], []>} : vector<32x8xf32>, vector<8x128xf32>, vector<32x128xf32> -> vector<32x128xf32>
    %106 = vector.broadcast %104 : vector<32x1xf32> to vector<32x128xf32>
    %107 = arith.addf %105, %106 : vector<32x128xf32>
    %cst_29 = arith.constant 0.000000e+00 : f32
    %108 = vector.broadcast %cst_29 : f32 to vector<32x128xf32>
    %109 = arith.maximumf %107, %108 : vector<32x128xf32>
    %c0_30 = arith.constant 0 : index
    %c0_31 = arith.constant 0 : index
    %110 = vector.load %arg7[%c0_30, %c0_31] : memref<32x32xf32, #tpu.memory_space<vmem>>, vector<32x32xf32>
    %c0_32 = arith.constant 0 : index
    %c0_33 = arith.constant 0 : index
    %111 = vector.load %arg8[%c0_32, %c0_33] : memref<32x1xf32, #tpu.memory_space<vmem>>, vector<32x1xf32>
    %cst_34 = arith.constant dense<0.000000e+00> : vector<32x128xf32>
    %112 = tpu.matmul %110, %109, %cst_34 {dimension_numbers = #tpu.dot_dimension_numbers<[1], [0], [0], [1], [0, 0, 1, 1], [], []>} : vector<32x32xf32>, vector<32x128xf32>, vector<32x128xf32> -> vector<32x128xf32>
    %113 = vector.broadcast %111 : vector<32x1xf32> to vector<32x128xf32>
    %114 = arith.addf %112, %113 : vector<32x128xf32>
    %cst_35 = arith.constant 0.000000e+00 : f32
    %115 = vector.broadcast %cst_35 : f32 to vector<32x128xf32>
    %116 = arith.maximumf %114, %115 : vector<32x128xf32>
    %c0_36 = arith.constant 0 : index
    %c0_37 = arith.constant 0 : index
    %117 = vector.load %arg9[%c0_36, %c0_37] : memref<16x32xf32, #tpu.memory_space<vmem>>, vector<16x32xf32>
    %c0_38 = arith.constant 0 : index
    %c0_39 = arith.constant 0 : index
    %118 = vector.load %arg10[%c0_38, %c0_39] : memref<16x1xf32, #tpu.memory_space<vmem>>, vector<16x1xf32>
    %cst_40 = arith.constant dense<0.000000e+00> : vector<16x128xf32>
    %119 = tpu.matmul %117, %116, %cst_40 {dimension_numbers = #tpu.dot_dimension_numbers<[1], [0], [0], [1], [0, 0, 1, 1], [], []>} : vector<16x32xf32>, vector<32x128xf32>, vector<16x128xf32> -> vector<16x128xf32>
    %120 = vector.broadcast %118 : vector<16x1xf32> to vector<16x128xf32>
    %121 = arith.addf %119, %120 : vector<16x128xf32>
    %c0_41 = arith.constant 0 : index
    %c0_42 = arith.constant 0 : index
    %c0_43 = arith.constant 0 : index
    %122 = vector.load %arg11[%c0_41, %c0_42, %c0_43] : memref<1x16x128xf32, #tpu.memory_space<vmem>>, vector<1x16x128xf32>
    %123 = vector.shape_cast %122 : vector<1x16x128xf32> to vector<16x128xf32>
    %124 = vector.shape_cast %121 : vector<16x128xf32> to vector<1x16x128xf32>
    tpu.vector_store %arg11[%c0_41, %c0_42, %c0_43], %124 {strides = array<i32>} : memref<1x16x128xf32, #tpu.memory_space<vmem>>, vector<1x16x128xf32>,
    return
  }
  func.func @transform_0(%arg0: i32, %arg1: i32) -> (i32, i32, i32) {
    %c0_i32 = arith.constant 0 : i32
    %c0_i32_0 = arith.constant 0 : i32
    %c0_i32_1 = arith.constant 0 : i32
    return %arg0, %c0_i32, %c0_i32_0 : i32, i32, i32
  }
  func.func @transform_1(%arg0: i32, %arg1: i32) -> (i32, i32, i32) {
    %c0_i32 = arith.constant 0 : i32
    %c0_i32_0 = arith.constant 0 : i32
    return %arg0, %c0_i32, %arg1 : i32, i32, i32
  }
  func.func @transform_2(%arg0: i32, %arg1: i32) -> (i32, i32, i32) {
    %c0_i32 = arith.constant 0 : i32
    %c0_i32_0 = arith.constant 0 : i32
    %c0_i32_1 = arith.constant 0 : i32
    return %arg0, %c0_i32, %c0_i32_0 : i32, i32, i32
  }
  func.func @transform_3(%arg0: i32, %arg1: i32) -> (i32, i32) {
    %c0_i32 = arith.constant 0 : i32
    %c0_i32_0 = arith.constant 0 : i32
    %c0_i32_1 = arith.constant 0 : i32
    return %c0_i32, %c0_i32_0 : i32, i32
  }
  func.func @transform_4(%arg0: i32, %arg1: i32) -> (i32, i32) {
    %c0_i32 = arith.constant 0 : i32
    %c0_i32_0 = arith.constant 0 : i32
    %c0_i32_1 = arith.constant 0 : i32
    return %c0_i32, %c0_i32_0 : i32, i32
  }
  func.func @transform_5(%arg0: i32, %arg1: i32) -> (i32, i32) {
    %c0_i32 = arith.constant 0 : i32
    %c0_i32_0 = arith.constant 0 : i32
    %c0_i32_1 = arith.constant 0 : i32
    return %c0_i32, %c0_i32_0 : i32, i32
  }
  func.func @transform_6(%arg0: i32, %arg1: i32) -> (i32, i32) {
    %c0_i32 = arith.constant 0 : i32
    %c0_i32_0 = arith.constant 0 : i32
    %c0_i32_1 = arith.constant 0 : i32
    return %c0_i32, %c0_i32_0 : i32, i32
  }
  func.func @transform_7(%arg0: i32, %arg1: i32) -> (i32, i32) {
    %c0_i32 = arith.constant 0 : i32
    %c0_i32_0 = arith.constant 0 : i32
    %c0_i32_1 = arith.constant 0 : i32
    return %c0_i32, %c0_i32_0 : i32, i32
  }
  func.func @transform_8(%arg0: i32, %arg1: i32) -> (i32, i32) {
    %c0_i32 = arith.constant 0 : i32
    %c0_i32_0 = arith.constant 0 : i32
    %c0_i32_1 = arith.constant 0 : i32
    return %c0_i32, %c0_i32_0 : i32, i32
  }
  func.func @transform_9(%arg0: i32, %arg1: i32) -> (i32, i32, i32) {
    %c0_i32 = arith.constant 0 : i32
    %c0_i32_0 = arith.constant 0 : i32
    return %arg0, %c0_i32, %arg1 : i32, i32, i32
  }
}

</mosaic_0001>

<llo_original>
// kernel: tpu_custom_call.1
$region0: #{tpu_custom_call.1}
  #allocation0 [shape = 'u32[]', space=smem, size = 0x4, offset = 0x4, fixed_abs, tag = 'smem constant byte address 0x4 - core index']
  #allocation1 [shape = 'u32[144,128]{1,0:T(1,128)}', space=vmem, size = 0x12000, scoped, tag = 'internal scratch']
  %s0 = inlined_call_operand.vmem [shape: f32[2,3,24], index: 0, kind: input, shape index: {}]
  %s1 = inlined_call_operand.vmem [shape: f32[2,3,128], index: 1, kind: input, shape index: {}]
  %s2 = inlined_call_operand.vmem [shape: f32[2,8,24], index: 2, kind: input, shape index: {}]
  %s3 = inlined_call_operand.vmem [shape: f32[32,8], index: 3, kind: input, shape index: {}]
  %s4 = inlined_call_operand.vmem [shape: f32[32,1], index: 4, kind: input, shape index: {}]
  %s5 = inlined_call_operand.vmem [shape: f32[32,32], index: 5, kind: input, shape index: {}]
  %s6 = inlined_call_operand.vmem [shape: f32[32,1], index: 6, kind: input, shape index: {}]
  %s7 = inlined_call_operand.vmem [shape: f32[16,32], index: 7, kind: input, shape index: {}]
  %s8 = inlined_call_operand.vmem [shape: f32[16,1], index: 8, kind: input, shape index: {}]
  %s9 = inlined_call_operand.hbm [shape: f32[2,16,128], index: 9, kind: output, shape index: {}]
  %s10 = sld [smem:[#allocation0]]
  $region69: #{tpu_custom_call.1} parent=0
    _
  %s12 = ssub.s32 1, %s10
  %s13 = scalar_select 0, %s12, %s10
  $region1: #{tpu_custom_call.1} parent=0
    #allocation2 [shape = 'u8[16384]{0}', space=vmem, size = 0x4000, scoped, tag = 'output window, operand 0']
    #allocation3 [shape = 's32[2]{0}', space=sflag, size = 0x8, scoped, tag = 'scoped memory for tpu_custom_call.1']
    %14 = vsyncpa [#allocation3], 0
    %s15 = scalar_lea.sflag [#allocation3], 1
    %16 = vsyncpa %s15, 0
    loop: start=0, step=1, limit=4
    $region2: #{tpu_custom_call.1} parent=1 // loop_pre_header
      _
    $region3: #{tpu_custom_call.1} parent=1 // loop_header
      %s18 = sphi 0, %s22
      %p19 = scmp.ge.s32.totalorder %s18, 4
      %s25 = sphi 0, %s37
      %s26 = sphi 0, %s33
      %s27 = sphi 0, %s25
      %s28 = sphi 0, %s26
      %s29 = sphi 0, %s27
      %s30 = sphi 0, %s28
      %s40 = sphi 0, %s42
      %s43 = sphi 0, %s40
      %s44 = sphi 0, %s43
      %s60 = sphi 0, %s44
      %s68 = sphi 0, %s70
      %s71 = sphi 0, %s68
      %s72 = sphi 0, %s71
      %s88 = sphi 0, %s72
      %s94 = sphi 0, %s96
      %s97 = sphi 0, %s94
      %s98 = sphi 0, %s97
      %s114 = sphi 0, %s98
      %s118 = sphi 0, %s118
      %s120 = sphi 0, %s118
      %s121 = sphi 0, %s120
      %s135 = sphi 0, %s121
      %s139 = sphi 0, %s139
      %s141 = sphi 0, %s139
      %s142 = sphi 0, %s141
      %s156 = sphi 0, %s142
      %s160 = sphi 0, %s160
      %s162 = sphi 0, %s160
      %s163 = sphi 0, %s162
      %s177 = sphi 0, %s163
      %s181 = sphi 0, %s181
      %s183 = sphi 0, %s181
      %s184 = sphi 0, %s183
      %s198 = sphi 0, %s184
      %s202 = sphi 0, %s202
      %s204 = sphi 0, %s202
      %s205 = sphi 0, %s204
      %s219 = sphi 0, %s205
      %s223 = sphi 0, %s223
      %s225 = sphi 0, %s223
      %s226 = sphi 0, %s225
      %s240 = sphi 0, %s226
      %s248 = sphi 0, %s250
      %s251 = sphi 0, %s248
      %s252 = sphi 0, %s251
      %s268 = sphi 0, %s252
    $region4: #{tpu_custom_call.1} parent=1 // loop_header_branch
      %21 = sbr.rel (%p19) target = $region8
    $region5: #{tpu_custom_call.1} parent=1 // loop_body
      %s23 = ssub.s32 %s18, 1
      %s24 = ssub.s32 %s18, 2
      %s31 = sadd.s32 1, %s26
      %p32 = scmp.ge.s32.totalorder %s31, 1
      %s33 = scalar_select %p32, 0, %s31
      %s34 = sadd.s32 1, %s25
      %s35 = scalar_select %p32, %s34, %s25
      %p36 = scmp.ge.s32.totalorder %s35, 2
      %s37 = scalar_select %p36, 0, %s35
      %s38 = ssub.s32 %s25, %s37
      %p39 = scmp.eq.s32.totalorder %s38, 0
      %s41 = sadd.s32 %s40, 1
      %s42 = scalar_select %p39, %s40, %s41
      %p45 = pneg %p39
      %p46 = scmp.eq.s32.totalorder %s18, 1
      %p47 = por %p45, %p46
      %p48 = scmp.ne.s32.totalorder %s40, %s43
      %p49 = scmp.eq.s32.totalorder %s18, 0
      %p50 = por %p48, %p49
      %p51 = scmp.ne.s32.totalorder %s40, %s43
      %p52 = scmp.eq.s32.totalorder %s23, 1
      %p53 = por %p51, %p52
      %p54 = scmp.ne.s32.totalorder %s43, %s44
      %p55 = scmp.eq.s32.totalorder %s23, 0
      %p56 = por %p54, %p55
      %p57 = scmp.ne.s32.totalorder %s43, %s44
      %p58 = scmp.eq.s32.totalorder %s24, 1
      %p59 = por %p57, %p58
      %p61 = scmp.ne.s32.totalorder %s44, %s60
      %p62 = scmp.eq.s32.totalorder %s24, 0
      %p63 = por %p61, %p62
      %s64 = ssub.s32 %s25, %s37
      %s65 = ssub.s32 %s26, %s33
      %s66 = sor.u32 %s64, %s65
      %p67 = scmp.eq.s32.totalorder %s66, 0
      %s69 = sadd.s32 %s68, 1
      %s70 = scalar_select %p67, %s68, %s69
      %p73 = pneg %p67
      %p74 = scmp.eq.s32.totalorder %s18, 1
      %p75 = por %p73, %p74
      %p76 = scmp.ne.s32.totalorder %s68, %s71
      %p77 = scmp.eq.s32.totalorder %s18, 0
      %p78 = por %p76, %p77
      %p79 = scmp.ne.s32.totalorder %s68, %s71
      %p80 = scmp.eq.s32.totalorder %s23, 1
      %p81 = por %p79, %p80
      %p82 = scmp.ne.s32.totalorder %s71, %s72
      %p83 = scmp.eq.s32.totalorder %s23, 0
      %p84 = por %p82, %p83
      %p85 = scmp.ne.s32.totalorder %s71, %s72
      %p86 = scmp.eq.s32.totalorder %s24, 1
      %p87 = por %p85, %p86
      %p89 = scmp.ne.s32.totalorder %s72, %s88
      %p90 = scmp.eq.s32.totalorder %s24, 0
      %p91 = por %p89, %p90
      %s92 = ssub.s32 %s25, %s37
      %p93 = scmp.eq.s32.totalorder %s92, 0
      %s95 = sadd.s32 %s94, 1
      %s96 = scalar_select %p93, %s94, %s95
      %p99 = pneg %p93
      %p100 = scmp.eq.s32.totalorder %s18, 1
      %p101 = por %p99, %p100
      %p102 = scmp.ne.s32.totalorder %s94, %s97
      %p103 = scmp.eq.s32.totalorder %s18, 0
      %p104 = por %p102, %p103
      %p105 = scmp.ne.s32.totalorder %s94, %s97
      %p106 = scmp.eq.s32.totalorder %s23, 1
      %p107 = por %p105, %p106
      %p108 = scmp.ne.s32.totalorder %s97, %s98
      %p109 = scmp.eq.s32.totalorder %s23, 0
      %p110 = por %p108, %p109
      %p111 = scmp.ne.s32.totalorder %s97, %s98
      %p112 = scmp.eq.s32.totalorder %s24, 1
      %p113 = por %p111, %p112
      %p115 = scmp.ne.s32.totalorder %s98, %s114
      %p116 = scmp.eq.s32.totalorder %s24, 0
      %p117 = por %p115, %p116
      %s119 = sadd.s32 %s118, 1
      %p122 = scmp.eq.s32.totalorder %s18, 1
      %p123 = scmp.ne.s32.totalorder %s118, %s120
      %p124 = scmp.eq.s32.totalorder %s18, 0
      %p125 = por %p123, %p124
      %p126 = scmp.ne.s32.totalorder %s118, %s120
      %p127 = scmp.eq.s32.totalorder %s23, 1
      %p128 = por %p126, %p127
      %p129 = scmp.ne.s32.totalorder %s120, %s121
      %p130 = scmp.eq.s32.totalorder %s23, 0
      %p131 = por %p129, %p130
      %p132 = scmp.ne.s32.totalorder %s120, %s121
      %p133 = scmp.eq.s32.totalorder %s24, 1
      %p134 = por %p132, %p133
      %p136 = scmp.ne.s32.totalorder %s121, %s135
      %p137 = scmp.eq.s32.totalorder %s24, 0
      %p138 = por %p136, %p137
      %s140 = sadd.s32 %s139, 1
      %p143 = scmp.eq.s32.totalorder %s18, 1
      %p144 = scmp.ne.s32.totalorder %s139, %s141
      %p145 = scmp.eq.s32.totalorder %s18, 0
      %p146 = por %p144, %p145
      %p147 = scmp.ne.s32.totalorder %s139, %s141
      %p148 = scmp.eq.s32.totalorder %s23, 1
      %p149 = por %p147, %p148
      %p150 = scmp.ne.s32.totalorder %s141, %s142
      %p151 = scmp.eq.s32.totalorder %s23, 0
      %p152 = por %p150, %p151
      %p153 = scmp.ne.s32.totalorder %s141, %s142
      %p154 = scmp.eq.s32.totalorder %s24, 1
      %p155 = por %p153, %p154
      %p157 = scmp.ne.s32.totalorder %s142, %s156
      %p158 = scmp.eq.s32.totalorder %s24, 0
      %p159 = por %p157, %p158
      %s161 = sadd.s32 %s160, 1
      %p164 = scmp.eq.s32.totalorder %s18, 1
      %p165 = scmp.ne.s32.totalorder %s160, %s162
      %p166 = scmp.eq.s32.totalorder %s18, 0
      %p167 = por %p165, %p166
      %p168 = scmp.ne.s32.totalorder %s160, %s162
      %p169 = scmp.eq.s32.totalorder %s23, 1
      %p170 = por %p168, %p169
      %p171 = scmp.ne.s32.totalorder %s162, %s163
      %p172 = scmp.eq.s32.totalorder %s23, 0
      %p173 = por %p171, %p172
      %p174 = scmp.ne.s32.totalorder %s162, %s163
      %p175 = scmp.eq.s32.totalorder %s24, 1
      %p176 = por %p174, %p175
      %p178 = scmp.ne.s32.totalorder %s163, %s177
      %p179 = scmp.eq.s32.totalorder %s24, 0
      %p180 = por %p178, %p179
      %s182 = sadd.s32 %s181, 1
      %p185 = scmp.eq.s32.totalorder %s18, 1
      %p186 = scmp.ne.s32.totalorder %s181, %s183
      %p187 = scmp.eq.s32.totalorder %s18, 0
      %p188 = por %p186, %p187
      %p189 = scmp.ne.s32.totalorder %s181, %s183
      %p190 = scmp.eq.s32.totalorder %s23, 1
      %p191 = por %p189, %p190
      %p192 = scmp.ne.s32.totalorder %s183, %s184
      %p193 = scmp.eq.s32.totalorder %s23, 0
      %p194 = por %p192, %p193
      %p195 = scmp.ne.s32.totalorder %s183, %s184
      %p196 = scmp.eq.s32.totalorder %s24, 1
      %p197 = por %p195, %p196
      %p199 = scmp.ne.s32.totalorder %s184, %s198
      %p200 = scmp.eq.s32.totalorder %s24, 0
      %p201 = por %p199, %p200
      %s203 = sadd.s32 %s202, 1
      %p206 = scmp.eq.s32.totalorder %s18, 1
      %p207 = scmp.ne.s32.totalorder %s202, %s204
      %p208 = scmp.eq.s32.totalorder %s18, 0
      %p209 = por %p207, %p208
      %p210 = scmp.ne.s32.totalorder %s202, %s204
      %p211 = scmp.eq.s32.totalorder %s23, 1
      %p212 = por %p210, %p211
      %p213 = scmp.ne.s32.totalorder %s204, %s205
      %p214 = scmp.eq.s32.totalorder %s23, 0
      %p215 = por %p213, %p214
      %p216 = scmp.ne.s32.totalorder %s204, %s205
      %p217 = scmp.eq.s32.totalorder %s24, 1
      %p218 = por %p216, %p217
      %p220 = scmp.ne.s32.totalorder %s205, %s219
      %p221 = scmp.eq.s32.totalorder %s24, 0
      %p222 = por %p220, %p221
      %s224 = sadd.s32 %s223, 1
      %p227 = scmp.eq.s32.totalorder %s18, 1
      %p228 = scmp.ne.s32.totalorder %s223, %s225
      %p229 = scmp.eq.s32.totalorder %s18, 0
      %p230 = por %p228, %p229
      %p231 = scmp.ne.s32.totalorder %s223, %s225
      %p232 = scmp.eq.s32.totalorder %s23, 1
      %p233 = por %p231, %p232
      %p234 = scmp.ne.s32.totalorder %s225, %s226
      %p235 = scmp.eq.s32.totalorder %s23, 0
      %p236 = por %p234, %p235
      %p237 = scmp.ne.s32.totalorder %s225, %s226
      %p238 = scmp.eq.s32.totalorder %s24, 1
      %p239 = por %p237, %p238
      %p241 = scmp.ne.s32.totalorder %s226, %s240
      %p242 = scmp.eq.s32.totalorder %s24, 0
      %p243 = por %p241, %p242
      %s244 = ssub.s32 %s25, %s37
      %s245 = ssub.s32 %s26, %s33
      %s246 = sor.u32 %s244, %s245
      %p247 = scmp.eq.s32.totalorder %s246, 0
      %s249 = sadd.s32 %s248, 1
      %s250 = scalar_select %p247, %s248, %s249
      %p253 = pneg %p247
      %p254 = scmp.eq.s32.totalorder %s18, 1
      %p255 = por %p253, %p254
      %p256 = scmp.ne.s32.totalorder %s248, %s251
      %p257 = scmp.eq.s32.totalorder %s18, 0
      %p258 = por %p256, %p257
      %p259 = scmp.ne.s32.totalorder %s248, %s251
      %p260 = scmp.eq.s32.totalorder %s23, 1
      %p261 = por %p259, %p260
      %p262 = scmp.ne.s32.totalorder %s251, %s252
      %p263 = scmp.eq.s32.totalorder %s23, 0
      %p264 = por %p262, %p263
      %p265 = scmp.ne.s32.totalorder %s251, %s252
      %p266 = scmp.eq.s32.totalorder %s24, 1
      %p267 = por %p265, %p266
      %p269 = scmp.ne.s32.totalorder %s252, %s268
      %p270 = scmp.eq.s32.totalorder %s24, 0
      %p271 = por %p269, %p270
      %p272 = scmp.le.s32.totalorder 1, %s18
      %p273 = scmp.lt.s32.totalorder %s18, 3
      %p274 = pnand %p272, %p273
      %p275 = pneg %p274
      // Predicated region
      $region9: #{tpu_custom_call.1} parent=5 // pred_check
        _
      $region10: #{tpu_custom_call.1} parent=5 // pred_check_branch
        %277 = sbr.rel (%p274) target = $region12
      $region11: #{tpu_custom_call.1} parent=5 // pred_region
        %s278 = ssub.s32 %s18, 1
        // Predicated region
        $region13: #{tpu_custom_call.1} parent=11 // pred_check
          %p279 = pneg %p56
        $region14: #{tpu_custom_call.1} parent=11 // pred_check_branch
          %281 = sbr.rel (%p279) target = $region16
        $region15: #{tpu_custom_call.1} parent=11 // pred_region
          %p282 = scmp.lt.s32.totalorder %s27, 1
          %s283 = scalar_select %p282, %s27, 1
          %s284 = smul.addr %s283, 4
          %s285 = scalar_lea.vmem %s0, %s284
        $region16: #{tpu_custom_call.1} parent=11 // pred_fallthru
          _
        // Predicated region
        $region17: #{tpu_custom_call.1} parent=11 // pred_check
          %p286 = pneg %p110
        $region18: #{tpu_custom_call.1} parent=11 // pred_check_branch
          %288 = sbr.rel (%p286) target = $region20
        $region19: #{tpu_custom_call.1} parent=11 // pred_region
          %p289 = scmp.lt.s32.totalorder %s27, 1
          %s290 = scalar_select %p289, %s27, 1
          %s291 = smul.addr %s290, 8
          %s292 = scalar_lea.vmem %s2, %s291
        $region20: #{tpu_custom_call.1} parent=11 // pred_fallthru
          _
        // Predicated region
        $region21: #{tpu_custom_call.1} parent=11 // pred_check
          %p293 = pneg %p131
        $region22: #{tpu_custom_call.1} parent=11 // pred_check_branch
          %295 = sbr.rel (%p293) target = $region24
        $region23: #{tpu_custom_call.1} parent=11 // pred_region
          _
        $region24: #{tpu_custom_call.1} parent=11 // pred_fallthru
          _
        // Predicated region
        $region25: #{tpu_custom_call.1} parent=11 // pred_check
          %p296 = pneg %p152
        $region26: #{tpu_custom_call.1} parent=11 // pred_check_branch
          %298 = sbr.rel (%p296) target = $region28
        $region27: #{tpu_custom_call.1} parent=11 // pred_region
          _
        $region28: #{tpu_custom_call.1} parent=11 // pred_fallthru
          _
        // Predicated region
        $region29: #{tpu_custom_call.1} parent=11 // pred_check
          %p299 = pneg %p173
        $region30: #{tpu_custom_call.1} parent=11 // pred_check_branch
          %301 = sbr.rel (%p299) target = $region32
        $region31: #{tpu_custom_call.1} parent=11 // pred_region
          _
        $region32: #{tpu_custom_call.1} parent=11 // pred_fallthru
          _
        // Predicated region
        $region33: #{tpu_custom_call.1} parent=11 // pred_check
          %p302 = pneg %p194
        $region34: #{tpu_custom_call.1} parent=11 // pred_check_branch
          %304 = sbr.rel (%p302) target = $region36
        $region35: #{tpu_custom_call.1} parent=11 // pred_region
          _
        $region36: #{tpu_custom_call.1} parent=11 // pred_fallthru
          _
        // Predicated region
        $region37: #{tpu_custom_call.1} parent=11 // pred_check
          %p305 = pneg %p215
        $region38: #{tpu_custom_call.1} parent=11 // pred_check_branch
          %307 = sbr.rel (%p305) target = $region40
        $region39: #{tpu_custom_call.1} parent=11 // pred_region
          _
        $region40: #{tpu_custom_call.1} parent=11 // pred_fallthru
          _
        // Predicated region
        $region41: #{tpu_custom_call.1} parent=11 // pred_check
          %p308 = pneg %p236
        $region42: #{tpu_custom_call.1} parent=11 // pred_check_branch
          %310 = sbr.rel (%p308) target = $region44
        $region43: #{tpu_custom_call.1} parent=11 // pred_region
          _
        $region44: #{tpu_custom_call.1} parent=11 // pred_fallthru
          _
      $region12: #{tpu_custom_call.1} parent=5 // pred_fallthru
        _
      %p311 = scmp.lt.s32.totalorder %s18, 2
      // Predicated region
      $region45: #{tpu_custom_call.1} parent=5 // pred_check
        %p312 = pneg %p311
      $region46: #{tpu_custom_call.1} parent=5 // pred_check_branch
        %314 = sbr.rel (%p312) target = $region48
      $region47: #{tpu_custom_call.1} parent=5 // pred_region
        // Predicated region
        $region49: #{tpu_custom_call.1} parent=47 // pred_check
          %p315 = pneg %p78
        $region50: #{tpu_custom_call.1} parent=47 // pred_check_branch
          %317 = sbr.rel (%p315) target = $region52
        $region51: #{tpu_custom_call.1} parent=47 // pred_region
          %p318 = scmp.lt.s32.totalorder %s25, 1
          %s319 = scalar_select %p318, %s25, 1
          %p320 = scmp.lt.s32.totalorder %s26, 0
          %s321 = scalar_select %p320, %s26, 0
          %s322 = sadd.s32 %s321, %s319
          %s323 = smul.addr %s322, 4
          %s324 = scalar_lea.vmem %s1, %s323
        $region52: #{tpu_custom_call.1} parent=47 // pred_fallthru
          _
      $region48: #{tpu_custom_call.1} parent=5 // pred_fallthru
        _
      %p325 = scmp.le.s32.totalorder 1, %s18
      %p326 = scmp.lt.s32.totalorder %s18, 3
      %p327 = pnand %p325, %p326
      %p328 = pneg %p327
      // Predicated region
      $region53: #{tpu_custom_call.1} parent=5 // pred_check
        _
      $region54: #{tpu_custom_call.1} parent=5 // pred_check_branch
        %330 = sbr.rel (%p327) target = $region56
      $region55: #{tpu_custom_call.1} parent=5 // pred_region
        %s331 = ssub.s32 %s18, 1
        %p332 = scmp.lt.s32.totalorder %s27, 1
        %s333 = scalar_select %p332, %s27, 1
        %s334 = smul.addr %s333, 4
        %s335 = scalar_lea.vmem %s0, %s334
        %p336 = pneg %p56
        %p337 = pneg %p53
        %p338 = scmp.lt.s32.totalorder %s27, 1
        %s339 = scalar_select %p338, %s27, 1
        %p340 = scmp.lt.s32.totalorder %s28, 0
        %s341 = scalar_select %p340, %s28, 0
        %s342 = sadd.s32 %s341, %s339
        %s343 = smul.addr %s342, 4
        %s344 = scalar_lea.vmem %s1, %s343
        %p345 = pneg %p84
        %p346 = pneg %p81
        %p347 = scmp.lt.s32.totalorder %s27, 1
        %s348 = scalar_select %p347, %s27, 1
        %s349 = smul.addr %s348, 8
        %s350 = scalar_lea.vmem %s2, %s349
        %p351 = pneg %p110
        %p352 = pneg %p107
        %p353 = pneg %p131
        %p354 = pneg %p128
        %p355 = pneg %p152
        %p356 = pneg %p149
        %p357 = pneg %p173
        %p358 = pneg %p170
        %p359 = pneg %p194
        %p360 = pneg %p191
        %p361 = pneg %p215
        %p362 = pneg %p212
        %p363 = pneg %p236
        %p364 = pneg %p233
        %p365 = pneg %p264
        %p366 = pneg %p261
        %s367 = sand.u32 %s251, 1
        %s368 = scalar_lea.sflag [#allocation3], %s367
        %s369 = sand.u32 %s251, 1
        %s370 = smul.addr %s369, 16
        %s371 = scalar_lea.vmem [#allocation2], %s370
        %p372 = scmp.lt.s32.totalorder %s27, 1
        %s373 = scalar_select %p372, %s27, 1
        %s374 = smul.addr %s373, 4
        %s375 = scalar_lea.vmem %s0, %s374
        %p376 = scmp.lt.s32.totalorder %s27, 1
        %s377 = scalar_select %p376, %s27, 1
        %p378 = scmp.lt.s32.totalorder %s28, 0
        %s379 = scalar_select %p378, %s28, 0
        %s380 = sadd.s32 %s379, %s377
        %s381 = smul.addr %s380, 4
        %s382 = scalar_lea.vmem %s1, %s381
        %p383 = scmp.lt.s32.totalorder %s27, 1
        %s384 = scalar_select %p383, %s27, 1
        %s385 = smul.addr %s384, 8
        %s386 = scalar_lea.vmem %s2, %s385
        %v387 = vld [vmem:[%s375] sm:$0x7]
        %v388 = vld [vmem:[%s382] sm:$0x7]
        %v389 = vld [vmem:[%s386] sm:$0xff]
        %390 = vxpose.xlu0.b32.start [1/16] %v387, 128
        %391 = vxpose.xlu0.b32.cont [2/16] 0.0, 128
        %392 = vxpose.xlu0.b32.cont [3/16] 0.0, 128
        %393 = vxpose.xlu0.b32.cont [4/16] 0.0, 128
        %394 = vxpose.xlu0.b32.cont [5/16] 0.0, 128
        %395 = vxpose.xlu0.b32.cont [6/16] 0.0, 128
        %396 = vxpose.xlu0.b32.cont [7/16] 0.0, 128
        %397 = vxpose.xlu0.b32.cont [8/16] 0.0, 128
        %398 = vxpose.xlu0.b32.cont [9/16] 0.0, 128
        %399 = vxpose.xlu0.b32.cont [10/16] 0.0, 128
        %400 = vxpose.xlu0.b32.cont [11/16] 0.0, 128
        %401 = vxpose.xlu0.b32.cont [12/16] 0.0, 128
        %402 = vxpose.xlu0.b32.cont [13/16] 0.0, 128
        %403 = vxpose.xlu0.b32.cont [14/16] 0.0, 128
        %404 = vxpose.xlu0.b32.cont [15/16] 0.0, 128
        %405 = vxpose.xlu0.b32.end [16/16] 0.0, 128
        %v406 = vpop.trf.xlu0
        %v407 = vpop.trf.xlu0
        %v408 = vpop.trf.xlu0
        %v409 = vpop.trf.xlu0
        %v410 = vpop.trf.xlu0
        %v411 = vpop.trf.xlu0
        %v412 = vpop.trf.xlu0
        %v413 = vpop.trf.xlu0
        %v414 = vpop.trf.xlu0
        %v415 = vpop.trf.xlu0
        %v416 = vpop.trf.xlu0
        %v417 = vpop.trf.xlu0
        %v418 = vpop.trf.xlu0
        %v419 = vpop.trf.xlu0
        %v420 = vpop.trf.xlu0
        %v421 = vpop.trf.xlu0
        %423 = vset.pattern.permute.xlu0 0
        %424 = vperm.xlu0 %423, %v406
        %v425 = vpop.permute.xlu0 %424
        %428 = vset.pattern.permute.xlu0 0
        %429 = vperm.xlu0 %428, %v407
        %v430 = vpop.permute.xlu0 %429
        %433 = vset.pattern.permute.xlu0 0
        %434 = vperm.xlu0 %433, %v408
        %v435 = vpop.permute.xlu0 %434
        %v437 = vlaneseq
        %v438 = vshrl.u32 %v437, 7
        %v439 = vsub.s32 0, %v438
        %v440 = vrot.slane %v388, %v439
        %v441 = vsub.f32 %v425, %v440
        %v442 = vsub.f32 %v430, %v440
        %v443 = vsub.f32 %v435, %v440
        %v444 = vmul.f32 %v441, %v441
        %v445 = vmul.f32 %v442, %v442
        %v446 = vmul.f32 %v443, %v443
        %447 = vset.pattern.permute.xlu0 1
        %448 = vperm.xlu0 %447, %v406
        %v449 = vpop.permute.xlu0 %448
        %451 = vset.pattern.permute.xlu0 1
        %452 = vperm.xlu0 %451, %v407
        %v453 = vpop.permute.xlu0 %452
        %455 = vset.pattern.permute.xlu0 1
        %456 = vperm.xlu0 %455, %v408
        %v457 = vpop.permute.xlu0 %456
        %v459 = vlaneseq
        %v460 = vshrl.u32 %v459, 7
        %v461 = vsub.s32 1, %v460
        %v462 = vrot.slane %v388, %v461
        %v463 = vsub.f32 %v449, %v462
        %v464 = vsub.f32 %v453, %v462
        %v465 = vsub.f32 %v457, %v462
        %v466 = vmul.f32 %v463, %v463
        %v467 = vmul.f32 %v464, %v464
        %v468 = vmul.f32 %v465, %v465
        %v469 = vadd.f32 %v444, %v466
        %v470 = vadd.f32 %v445, %v467
        %v471 = vadd.f32 %v446, %v468
        %472 = vset.pattern.permute.xlu0 2
        %473 = vperm.xlu0 %472, %v406
        %v474 = vpop.permute.xlu0 %473
        %476 = vset.pattern.permute.xlu0 2
        %477 = vperm.xlu0 %476, %v407
        %v478 = vpop.permute.xlu0 %477
        %480 = vset.pattern.permute.xlu0 2
        %481 = vperm.xlu0 %480, %v408
        %v482 = vpop.permute.xlu0 %481
        %v484 = vlaneseq
        %v485 = vshrl.u32 %v484, 7
        %v486 = vsub.s32 2, %v485
        %v487 = vrot.slane %v388, %v486
        %v488 = vsub.f32 %v474, %v487
        %v489 = vsub.f32 %v478, %v487
        %v490 = vsub.f32 %v482, %v487
        %v491 = vmul.f32 %v488, %v488
        %v492 = vmul.f32 %v489, %v489
        %v493 = vmul.f32 %v490, %v490
        %v494 = vadd.f32 %v469, %v491
        %v495 = vadd.f32 %v470, %v492
        %v496 = vadd.f32 %v471, %v493
        %v497 = vlaneseq
        %v498 = vshrl.u32 %v497, 7
        %v499 = vadd.s32 %v498, 8
        %v500 = vadd.s32 %v498, 16
        %v501 = vmin.f32 %v494, %v495
        %v502 = vmin.f32 %v501, %v496
        %v503 = vrot.slane %v502, 4
        %v504 = vmin.f32 %v502, %v503
        %v505 = vrot.slane %v504, 2
        %v506 = vmin.f32 %v504, %v505
        %v507 = vrot.slane %v506, 1
        %v508 = vmin.f32 %v506, %v507
        %vm509 = vcmp.eq.f32.partialorder %v494, %v508
        %vm510 = vcmp.eq.f32.partialorder %v495, %v508
        %vm511 = vcmp.eq.f32.partialorder %v496, %v508
        %v512 = vsel %vm509, %v498, 24
        %v513 = vsel %vm510, %v499, 24
        %v514 = vsel %vm511, %v500, 24
        %vm515 = vcmp.lt.s32.totalorder %v512, %v513
        %v516 = vsel %vm515, %v512, %v513
        %vm517 = vcmp.lt.s32.totalorder %v516, %v514
        %v518 = vsel %vm517, %v516, %v514
        %v519 = vrot.slane %v518, 4
        %vm520 = vcmp.lt.s32.totalorder %v518, %v519
        %v521 = vsel %vm520, %v518, %v519
        %v522 = vrot.slane %v521, 2
        %vm523 = vcmp.lt.s32.totalorder %v521, %v522
        %v524 = vsel %vm523, %v521, %v522
        %v525 = vrot.slane %v524, 1
        %vm526 = vcmp.lt.s32.totalorder %v524, %v525
        %v527 = vsel %vm526, %v524, %v525
        %vm528 = vcmp.eq.s32.totalorder %v498, %v527
        %vm529 = vcmp.eq.s32.totalorder %v499, %v527
        %vm530 = vcmp.eq.s32.totalorder %v500, %v527
        %v531 = vrsqrt.pop %v508
        %v532 = vmul.f32 %v508, %v531
        %vm533 = vcmp.eq.f32.partialorder %v508, inf
        %v534 = vsel %vm533, %v508, %v532
        %vm535 = vcmp.eq.f32.partialorder %v508, 0.0
        %v536 = vand.u32 %v508, 2147483648
        %v537 = vsel %vm535, %v536, %v534
        %v538 = vadd.f32 %v537, 1e-10
        %v539 = vrcp.pop %v538
        %v540 = vsel %vm528, %v539, 0.0
        %v541 = vsel %vm529, %v539, 0.0
        %v542 = vsel %vm530, %v539, 0.0
        %v543 = vsel %vm528, 3e+38, %v494
        %v544 = vsel %vm529, 3e+38, %v495
        %v545 = vsel %vm530, 3e+38, %v496
        %v546 = vmin.f32 %v543, %v544
        %v547 = vmin.f32 %v546, %v545
        %v548 = vrot.slane %v547, 4
        %v549 = vmin.f32 %v547, %v548
        %v550 = vrot.slane %v549, 2
        %v551 = vmin.f32 %v549, %v550
        %v552 = vrot.slane %v551, 1
        %v553 = vmin.f32 %v551, %v552
        %vm554 = vcmp.eq.f32.partialorder %v543, %v553
        %vm555 = vcmp.eq.f32.partialorder %v544, %v553
        %vm556 = vcmp.eq.f32.partialorder %v545, %v553
        %v557 = vsel %vm554, %v498, 24
        %v558 = vsel %vm555, %v499, 24
        %v559 = vsel %vm556, %v500, 24
        %vm560 = vcmp.lt.s32.totalorder %v557, %v558
        %v561 = vsel %vm560, %v557, %v558
        %vm562 = vcmp.lt.s32.totalorder %v561, %v559
        %v563 = vsel %vm562, %v561, %v559
        %v564 = vrot.slane %v563, 4
        %vm565 = vcmp.lt.s32.totalorder %v563, %v564
        %v566 = vsel %vm565, %v563, %v564
        %v567 = vrot.slane %v566, 2
        %vm568 = vcmp.lt.s32.totalorder %v566, %v567
        %v569 = vsel %vm568, %v566, %v567
        %v570 = vrot.slane %v569, 1
        %vm571 = vcmp.lt.s32.totalorder %v569, %v570
        %v572 = vsel %vm571, %v569, %v570
        %vm573 = vcmp.eq.s32.totalorder %v498, %v572
        %vm574 = vcmp.eq.s32.totalorder %v499, %v572
        %vm575 = vcmp.eq.s32.totalorder %v500, %v572
        %v576 = vrsqrt.pop %v553
        %v577 = vmul.f32 %v553, %v576
        %vm578 = vcmp.eq.f32.partialorder %v553, inf
        %v579 = vsel %vm578, %v553, %v577
        %vm580 = vcmp.eq.f32.partialorder %v553, 0.0
        %v581 = vand.u32 %v553, 2147483648
        %v582 = vsel %vm580, %v581, %v579
        %v583 = vadd.f32 %v582, 1e-10
        %v584 = vrcp.pop %v583
        %v585 = vsel %vm573, %v584, 0.0
        %v586 = vsel %vm574, %v584, 0.0
        %v587 = vsel %vm575, %v584, 0.0
        %v588 = vadd.f32 %v540, %v585
        %v589 = vadd.f32 %v541, %v586
        %v590 = vadd.f32 %v542, %v587
        %v591 = vadd.f32 %v539, %v584
        %v592 = vsel %vm573, 3e+38, %v543
        %v593 = vsel %vm574, 3e+38, %v544
        %v594 = vsel %vm575, 3e+38, %v545
        %v595 = vmin.f32 %v592, %v593
        %v596 = vmin.f32 %v595, %v594
        %v597 = vrot.slane %v596, 4
        %v598 = vmin.f32 %v596, %v597
        %v599 = vrot.slane %v598, 2
        %v600 = vmin.f32 %v598, %v599
        %v601 = vrot.slane %v600, 1
        %v602 = vmin.f32 %v600, %v601
        %vm603 = vcmp.eq.f32.partialorder %v592, %v602
        %vm604 = vcmp.eq.f32.partialorder %v593, %v602
        %vm605 = vcmp.eq.f32.partialorder %v594, %v602
        %v606 = vsel %vm603, %v498, 24
        %v607 = vsel %vm604, %v499, 24
        %v608 = vsel %vm605, %v500, 24
        %vm609 = vcmp.lt.s32.totalorder %v606, %v607
        %v610 = vsel %vm609, %v606, %v607
        %vm611 = vcmp.lt.s32.totalorder %v610, %v608
        %v612 = vsel %vm611, %v610, %v608
        %v613 = vrot.slane %v612, 4
        %vm614 = vcmp.lt.s32.totalorder %v612, %v613
        %v615 = vsel %vm614, %v612, %v613
        %v616 = vrot.slane %v615, 2
        %vm617 = vcmp.lt.s32.totalorder %v615, %v616
        %v618 = vsel %vm617, %v615, %v616
        %v619 = vrot.slane %v618, 1
        %vm620 = vcmp.lt.s32.totalorder %v618, %v619
        %v621 = vsel %vm620, %v618, %v619
        %vm622 = vcmp.eq.s32.totalorder %v498, %v621
        %vm623 = vcmp.eq.s32.totalorder %v499, %v621
        %vm624 = vcmp.eq.s32.totalorder %v500, %v621
        %v625 = vrsqrt.pop %v602
        %v626 = vmul.f32 %v602, %v625
        %vm627 = vcmp.eq.f32.partialorder %v602, inf
        %v628 = vsel %vm627, %v602, %v626
        %vm629 = vcmp.eq.f32.partialorder %v602, 0.0
        %v630 = vand.u32 %v602, 2147483648
        %v631 = vsel %vm629, %v630, %v628
        %v632 = vadd.f32 %v631, 1e-10
        %v633 = vrcp.pop %v632
        %v634 = vsel %vm622, %v633, 0.0
        %v635 = vsel %vm623, %v633, 0.0
        %v636 = vsel %vm624, %v633, 0.0
        %v637 = vadd.f32 %v588, %v634
        %v638 = vadd.f32 %v589, %v635
        %v639 = vadd.f32 %v590, %v636
        %v640 = vadd.f32 %v591, %v633
        %vm641 = vcmask 195584
        %v643 = vsel %vm641, %v389, 0
        %645 = vmatprep.subr.mxu0 0.0
        %646 = vmatpush1.msra.mxu0 %v637
        %647 = vmatprep.subr.mxu0 0.0
        %648 = vmatpush1.msra.mxu0 %v638
        %649 = vmatprep.subr.mxu0 0.0
        %650 = vmatpush1.msra.mxu0 %v639
        %651 = vmatprep.subr.mxu0 0.0
        %652 = vmatpush1.msra.mxu0 0.0
        %653 = vmatprep.subr.mxu0 0.0
        %654 = vmatpush1.msra.mxu0 0.0
        %655 = vmatprep.subr.mxu0 0.0
        %656 = vmatpush1.msra.mxu0 0.0
        %657 = vmatprep.subr.mxu0 0.0
        %658 = vmatpush1.msra.mxu0 0.0
        %659 = vmatprep.subr.mxu0 0.0
        %660 = vmatpush1.msra.mxu0 0.0
        %661 = vmatprep.subr.mxu0 0.0
        %662 = vmatpush1.msra.mxu0 0.0
        %663 = vmatprep.subr.mxu0 0.0
        %664 = vmatpush1.msra.mxu0 0.0
        %665 = vmatprep.subr.mxu0 0.0
        %666 = vmatpush1.msra.mxu0 0.0
        %667 = vmatprep.subr.mxu0 0.0
        %668 = vmatpush1.msra.mxu0 0.0
        %669 = vmatprep.subr.mxu0 0.0
        %670 = vmatpush1.msra.mxu0 0.0
        %671 = vmatprep.subr.mxu0 0.0
        %672 = vmatpush1.msra.mxu0 0.0
        %673 = vmatprep.subr.mxu0 0.0
        %674 = vmatpush1.msra.mxu0 0.0
        %675 = vmatprep.subr.mxu0 0.0
        %676 = vmatpush1.msra.mxu0 0.0
        %677 = vmatprep.subr.mxu0 0.0
        %678 = vmatpush1.msra.mxu0 0.0
        %679 = vmatprep.subr.mxu0 0.0
        %680 = vmatpush1.msra.mxu0 0.0
        %681 = vmatprep.subr.mxu0 0.0
        %682 = vmatpush1.msra.mxu0 0.0
        %683 = vmatprep.subr.mxu0 0.0
        %684 = vmatpush1.msra.mxu0 0.0
        %685 = vmatprep.subr.mxu0 0.0
        %686 = vmatpush1.msra.mxu0 0.0
        %687 = vmatprep.subr.mxu0 0.0
        %688 = vmatpush1.msra.mxu0 0.0
        %689 = vmatprep.subr.mxu0 0.0
        %690 = vmatpush1.msra.mxu0 0.0
        %691 = vmatprep.subr.mxu0 0.0
        %692 = vmatpush1.msra.mxu0 0.0
        %693 = vmatprep.subr.mxu0 0.0
        %694 = vmatpush1.msra.mxu0 0.0
        %695 = vmatprep.subr.mxu0 0.0
        %696 = vmatpush1.msra.mxu0 0.0
        %697 = vmatprep.subr.mxu0 0.0
        %698 = vmatpush1.msra.mxu0 0.0
        %699 = vmatprep.subr.mxu0 0.0
        %700 = vmatpush1.msra.mxu0 0.0
        %701 = vmatprep.subr.mxu0 0.0
        %702 = vmatpush1.msra.mxu0 0.0
        %703 = vmatprep.subr.mxu0 0.0
        %704 = vmatpush1.msra.mxu0 0.0
        %705 = vmatprep.subr.mxu0 0.0
        %706 = vmatpush1.msra.mxu0 0.0
        %707 = vmatprep.subr.mxu0 0.0
        %708 = vmatpush1.msra.mxu0 0.0
        %709 = vmatprep.mubr.f32.mxu0 0.0
        %710 = vmatmul.mubr.f32.gmra.mrb[0].mxu0 %v643
        %v711 = vpop.f32.mrb[0].mxu0
        %v712 = vadd.f32 0.0, %v711
        %v713 = vpop.f32.mrb[0].mxu0
        %714 = vdwg.mxu0
        %v715 = vrcp.pop %v640
        %v716 = vmul.f32 %v712, %v715
        %v717 = vld [vmem:[%s3] sm:$0xff]
        %v718 = vld [vmem:[%s3 + $0x8] sm:$0xff]
        %v719 = vld [vmem:[%s3 + $0x10] sm:$0xff]
        %v720 = vld [vmem:[%s3 + $0x18] sm:$0xff]
        %v721 = vld [vmem:[%s4] sm:$0xff]
        %v722 = vld [vmem:[%s4 + $0x8] sm:$0xff]
        %v723 = vld [vmem:[%s4 + $0x10] sm:$0xff]
        %v724 = vld [vmem:[%s4 + $0x18] sm:$0xff]
        %726 = vset.pattern.permute.xlu0 0
        %727 = vperm.xlu0 %726, %v721
        %v728 = vpop.permute.xlu0 %727
        %731 = vset.pattern.permute.xlu0 0
        %732 = vperm.xlu0 %731, %v722
        %v733 = vpop.permute.xlu0 %732
        %736 = vset.pattern.permute.xlu0 0
        %737 = vperm.xlu0 %736, %v723
        %v738 = vpop.permute.xlu0 %737
        %741 = vset.pattern.permute.xlu0 0
        %742 = vperm.xlu0 %741, %v724
        %v743 = vpop.permute.xlu0 %742
        %vm745 = vcmask 64512
        %v747 = vsel %vm745, %v717, 0
        %v750 = vsel %vm745, %v718, 0
        %v753 = vsel %vm745, %v719, 0
        %v756 = vsel %vm745, %v720, 0
        %758 = vmatprep.subr.mxu0 0.0
        %759 = vmatpush1.msra.mxu0 %v716
        %760 = vmatprep.subr.mxu0 0.0
        %761 = vmatpush1.msra.mxu0 0.0
        %762 = vmatprep.subr.mxu0 0.0
        %763 = vmatpush1.msra.mxu0 0.0
        %764 = vmatprep.subr.mxu0 0.0
        %765 = vmatpush1.msra.mxu0 0.0
        %766 = vmatprep.subr.mxu0 0.0
        %767 = vmatpush1.msra.mxu0 0.0
        %768 = vmatprep.subr.mxu0 0.0
        %769 = vmatpush1.msra.mxu0 0.0
        %770 = vmatprep.subr.mxu0 0.0
        %771 = vmatpush1.msra.mxu0 0.0
        %772 = vmatprep.subr.mxu0 0.0
        %773 = vmatpush1.msra.mxu0 0.0
        %774 = vmatprep.subr.mxu0 0.0
        %775 = vmatpush1.msra.mxu0 0.0
        %776 = vmatprep.subr.mxu0 0.0
        %777 = vmatpush1.msra.mxu0 0.0
        %778 = vmatprep.subr.mxu0 0.0
        %779 = vmatpush1.msra.mxu0 0.0
        %780 = vmatprep.subr.mxu0 0.0
        %781 = vmatpush1.msra.mxu0 0.0
        %782 = vmatprep.subr.mxu0 0.0
        %783 = vmatpush1.msra.mxu0 0.0
        %784 = vmatprep.subr.mxu0 0.0
        %785 = vmatpush1.msra.mxu0 0.0
        %786 = vmatprep.subr.mxu0 0.0
        %787 = vmatpush1.msra.mxu0 0.0
        %788 = vmatprep.subr.mxu0 0.0
        %789 = vmatpush1.msra.mxu0 0.0
        %790 = vmatprep.subr.mxu0 0.0
        %791 = vmatpush1.msra.mxu0 0.0
        %792 = vmatprep.subr.mxu0 0.0
        %793 = vmatpush1.msra.mxu0 0.0
        %794 = vmatprep.subr.mxu0 0.0
        %795 = vmatpush1.msra.mxu0 0.0
        %796 = vmatprep.subr.mxu0 0.0
        %797 = vmatpush1.msra.mxu0 0.0
        %798 = vmatprep.subr.mxu0 0.0
        %799 = vmatpush1.msra.mxu0 0.0
        %800 = vmatprep.subr.mxu0 0.0
        %801 = vmatpush1.msra.mxu0 0.0
        %802 = vmatprep.subr.mxu0 0.0
        %803 = vmatpush1.msra.mxu0 0.0
        %804 = vmatprep.subr.mxu0 0.0
        %805 = vmatpush1.msra.mxu0 0.0
        %806 = vmatprep.subr.mxu0 0.0
        %807 = vmatpush1.msra.mxu0 0.0
        %808 = vmatprep.subr.mxu0 0.0
        %809 = vmatpush1.msra.mxu0 0.0
        %810 = vmatprep.subr.mxu0 0.0
        %811 = vmatpush1.msra.mxu0 0.0
        %812 = vmatprep.subr.mxu0 0.0
        %813 = vmatpush1.msra.mxu0 0.0
        %814 = vmatprep.subr.mxu0 0.0
        %815 = vmatpush1.msra.mxu0 0.0
        %816 = vmatprep.subr.mxu0 0.0
        %817 = vmatpush1.msra.mxu0 0.0
        %818 = vmatprep.subr.mxu0 0.0
        %819 = vmatpush1.msra.mxu0 0.0
        %820 = vmatprep.subr.mxu0 0.0
        %821 = vmatpush1.msra.mxu0 0.0
        %822 = vmatprep.mubr.f32.mxu0 0.0
        %823 = vmatmul.mubr.f32.gmra.mrb[0].mxu0 %v747
        %v824 = vpop.f32.mrb[0].mxu0
        %v825 = vadd.f32 %v728, %v824
        %v826 = vpop.f32.mrb[0].mxu0
        %827 = vmatprep.mubr.f32.mxu0 0.0
        %828 = vmatmul.mubr.f32.gmra.mrb[0].mxu0 %v750
        %v829 = vpop.f32.mrb[0].mxu0
        %v830 = vadd.f32 %v733, %v829
        %v831 = vpop.f32.mrb[0].mxu0
        %832 = vmatprep.mubr.f32.mxu0 0.0
        %833 = vmatmul.mubr.f32.gmra.mrb[0].mxu0 %v753
        %v834 = vpop.f32.mrb[0].mxu0
        %v835 = vadd.f32 %v738, %v834
        %v836 = vpop.f32.mrb[0].mxu0
        %837 = vmatprep.mubr.f32.mxu0 0.0
        %838 = vmatmul.mubr.f32.gmra.mrb[0].mxu0 %v756
        %v839 = vpop.f32.mrb[0].mxu0
        %v840 = vadd.f32 %v743, %v839
        %v841 = vpop.f32.mrb[0].mxu0
        %842 = vdwg.mxu0
        %v843 = vmax.f32 %v825, 0.0
        %v844 = vmax.f32 %v830, 0.0
        %v845 = vmax.f32 %v835, 0.0
        %v846 = vmax.f32 %v840, 0.0
        %v847 = vld [vmem:[%s5] sm:$0xff]
        %v848 = vld [vmem:[%s5 + $0x8] sm:$0xff]
        %v849 = vld [vmem:[%s5 + $0x10] sm:$0xff]
        %v850 = vld [vmem:[%s5 + $0x18] sm:$0xff]
        %v851 = vld [vmem:[%s6] sm:$0xff]
        %v852 = vld [vmem:[%s6 + $0x8] sm:$0xff]
        %v853 = vld [vmem:[%s6 + $0x10] sm:$0xff]
        %v854 = vld [vmem:[%s6 + $0x18] sm:$0xff]
        %856 = vset.pattern.permute.xlu0 0
        %857 = vperm.xlu0 %856, %v851
        %v858 = vpop.permute.xlu0 %857
        %861 = vset.pattern.permute.xlu0 0
        %862 = vperm.xlu0 %861, %v852
        %v863 = vpop.permute.xlu0 %862
        %866 = vset.pattern.permute.xlu0 0
        %867 = vperm.xlu0 %866, %v853
        %v868 = vpop.permute.xlu0 %867
        %871 = vset.pattern.permute.xlu0 0
        %872 = vperm.xlu0 %871, %v854
        %v873 = vpop.permute.xlu0 %872
        %vm875 = vcmask 261120
        %v877 = vsel %vm875, %v847, 0
        %v880 = vsel %vm875, %v848, 0
        %v883 = vsel %vm875, %v849, 0
        %v886 = vsel %vm875, %v850, 0
        %888 = vmatprep.subr.mxu0 0.0
        %889 = vmatpush1.msra.mxu0 %v843
        %890 = vmatprep.subr.mxu0 0.0
        %891 = vmatpush1.msra.mxu0 %v844
        %892 = vmatprep.subr.mxu0 0.0
        %893 = vmatpush1.msra.mxu0 %v845
        %894 = vmatprep.subr.mxu0 0.0
        %895 = vmatpush1.msra.mxu0 %v846
        %896 = vmatprep.subr.mxu0 0.0
        %897 = vmatpush1.msra.mxu0 0.0
        %898 = vmatprep.subr.mxu0 0.0
        %899 = vmatpush1.msra.mxu0 0.0
        %900 = vmatprep.subr.mxu0 0.0
        %901 = vmatpush1.msra.mxu0 0.0
        %902 = vmatprep.subr.mxu0 0.0
        %903 = vmatpush1.msra.mxu0 0.0
        %904 = vmatprep.subr.mxu0 0.0
        %905 = vmatpush1.msra.mxu0 0.0
        %906 = vmatprep.subr.mxu0 0.0
        %907 = vmatpush1.msra.mxu0 0.0
        %908 = vmatprep.subr.mxu0 0.0
        %909 = vmatpush1.msra.mxu0 0.0
        %910 = vmatprep.subr.mxu0 0.0
        %911 = vmatpush1.msra.mxu0 0.0
        %912 = vmatprep.subr.mxu0 0.0
        %913 = vmatpush1.msra.mxu0 0.0
        %914 = vmatprep.subr.mxu0 0.0
        %915 = vmatpush1.msra.mxu0 0.0
        %916 = vmatprep.subr.mxu0 0.0
        %917 = vmatpush1.msra.mxu0 0.0
        %918 = vmatprep.subr.mxu0 0.0
        %919 = vmatpush1.msra.mxu0 0.0
        %920 = vmatprep.subr.mxu0 0.0
        %921 = vmatpush1.msra.mxu0 0.0
        %922 = vmatprep.subr.mxu0 0.0
        %923 = vmatpush1.msra.mxu0 0.0
        %924 = vmatprep.subr.mxu0 0.0
        %925 = vmatpush1.msra.mxu0 0.0
        %926 = vmatprep.subr.mxu0 0.0
        %927 = vmatpush1.msra.mxu0 0.0
        %928 = vmatprep.subr.mxu0 0.0
        %929 = vmatpush1.msra.mxu0 0.0
        %930 = vmatprep.subr.mxu0 0.0
        %931 = vmatpush1.msra.mxu0 0.0
        %932 = vmatprep.subr.mxu0 0.0
        %933 = vmatpush1.msra.mxu0 0.0
        %934 = vmatprep.subr.mxu0 0.0
        %935 = vmatpush1.msra.mxu0 0.0
        %936 = vmatprep.subr.mxu0 0.0
        %937 = vmatpush1.msra.mxu0 0.0
        %938 = vmatprep.subr.mxu0 0.0
        %939 = vmatpush1.msra.mxu0 0.0
        %940 = vmatprep.subr.mxu0 0.0
        %941 = vmatpush1.msra.mxu0 0.0
        %942 = vmatprep.subr.mxu0 0.0
        %943 = vmatpush1.msra.mxu0 0.0
        %944 = vmatprep.subr.mxu0 0.0
        %945 = vmatpush1.msra.mxu0 0.0
        %946 = vmatprep.subr.mxu0 0.0
        %947 = vmatpush1.msra.mxu0 0.0
        %948 = vmatprep.subr.mxu0 0.0
        %949 = vmatpush1.msra.mxu0 0.0
        %950 = vmatprep.subr.mxu0 0.0
        %951 = vmatpush1.msra.mxu0 0.0
        %952 = vmatprep.mubr.f32.mxu0 0.0
        %953 = vmatmul.mubr.f32.gmra.mrb[0].mxu0 %v877
        %v954 = vpop.f32.mrb[0].mxu0
        %v955 = vadd.f32 %v858, %v954
        %v956 = vpop.f32.mrb[0].mxu0
        %957 = vmatprep.mubr.f32.mxu0 0.0
        %958 = vmatmul.mubr.f32.gmra.mrb[0].mxu0 %v880
        %v959 = vpop.f32.mrb[0].mxu0
        %v960 = vadd.f32 %v863, %v959
        %v961 = vpop.f32.mrb[0].mxu0
        %962 = vmatprep.mubr.f32.mxu0 0.0
        %963 = vmatmul.mubr.f32.gmra.mrb[0].mxu0 %v883
        %v964 = vpop.f32.mrb[0].mxu0
        %v965 = vadd.f32 %v868, %v964
        %v966 = vpop.f32.mrb[0].mxu0
        %967 = vmatprep.mubr.f32.mxu0 0.0
        %968 = vmatmul.mubr.f32.gmra.mrb[0].mxu0 %v886
        %v969 = vpop.f32.mrb[0].mxu0
        %v970 = vadd.f32 %v873, %v969
        %v971 = vpop.f32.mrb[0].mxu0
        %972 = vdwg.mxu0
        %v973 = vmax.f32 %v955, 0.0
        %v974 = vmax.f32 %v960, 0.0
        %v975 = vmax.f32 %v965, 0.0
        %v976 = vmax.f32 %v970, 0.0
        %v977 = vld [vmem:[%s7] sm:$0xff]
        %v978 = vld [vmem:[%s7 + $0x8] sm:$0xff]
        %v979 = vld [vmem:[%s8] sm:$0xff]
        %v980 = vld [vmem:[%s8 + $0x8] sm:$0xff]
        %982 = vset.pattern.permute.xlu0 0
        %983 = vperm.xlu0 %982, %v979
        %v984 = vpop.permute.xlu0 %983
        %987 = vset.pattern.permute.xlu0 0
        %988 = vperm.xlu0 %987, %v980
        %v989 = vpop.permute.xlu0 %988
        %v992 = vsel %vm875, %v977, 0
        %v995 = vsel %vm875, %v978, 0
        %997 = vmatprep.subr.mxu0 0.0
        %998 = vmatpush1.msra.mxu0 %v973
        %999 = vmatprep.subr.mxu0 0.0
        %1000 = vmatpush1.msra.mxu0 %v974
        %1001 = vmatprep.subr.mxu0 0.0
        %1002 = vmatpush1.msra.mxu0 %v975
        %1003 = vmatprep.subr.mxu0 0.0
        %1004 = vmatpush1.msra.mxu0 %v976
        %1005 = vmatprep.subr.mxu0 0.0
        %1006 = vmatpush1.msra.mxu0 0.0
        %1007 = vmatprep.subr.mxu0 0.0
        %1008 = vmatpush1.msra.mxu0 0.0
        %1009 = vmatprep.subr.mxu0 0.0
        %1010 = vmatpush1.msra.mxu0 0.0
        %1011 = vmatprep.subr.mxu0 0.0
        %1012 = vmatpush1.msra.mxu0 0.0
        %1013 = vmatprep.subr.mxu0 0.0
        %1014 = vmatpush1.msra.mxu0 0.0
        %1015 = vmatprep.subr.mxu0 0.0
        %1016 = vmatpush1.msra.mxu0 0.0
        %1017 = vmatprep.subr.mxu0 0.0
        %1018 = vmatpush1.msra.mxu0 0.0
        %1019 = vmatprep.subr.mxu0 0.0
        %1020 = vmatpush1.msra.mxu0 0.0
        %1021 = vmatprep.subr.mxu0 0.0
        %1022 = vmatpush1.msra.mxu0 0.0
        %1023 = vmatprep.subr.mxu0 0.0
        %1024 = vmatpush1.msra.mxu0 0.0
        %1025 = vmatprep.subr.mxu0 0.0
        %1026 = vmatpush1.msra.mxu0 0.0
        %1027 = vmatprep.subr.mxu0 0.0
        %1028 = vmatpush1.msra.mxu0 0.0
        %1029 = vmatprep.subr.mxu0 0.0
        %1030 = vmatpush1.msra.mxu0 0.0
        %1031 = vmatprep.subr.mxu0 0.0
        %1032 = vmatpush1.msra.mxu0 0.0
        %1033 = vmatprep.subr.mxu0 0.0
        %1034 = vmatpush1.msra.mxu0 0.0
        %1035 = vmatprep.subr.mxu0 0.0
        %1036 = vmatpush1.msra.mxu0 0.0
        %1037 = vmatprep.subr.mxu0 0.0
        %1038 = vmatpush1.msra.mxu0 0.0
        %1039 = vmatprep.subr.mxu0 0.0
        %1040 = vmatpush1.msra.mxu0 0.0
        %1041 = vmatprep.subr.mxu0 0.0
        %1042 = vmatpush1.msra.mxu0 0.0
        %1043 = vmatprep.subr.mxu0 0.0
        %1044 = vmatpush1.msra.mxu0 0.0
        %1045 = vmatprep.subr.mxu0 0.0
        %1046 = vmatpush1.msra.mxu0 0.0
        %1047 = vmatprep.subr.mxu0 0.0
        %1048 = vmatpush1.msra.mxu0 0.0
        %1049 = vmatprep.subr.mxu0 0.0
        %1050 = vmatpush1.msra.mxu0 0.0
        %1051 = vmatprep.subr.mxu0 0.0
        %1052 = vmatpush1.msra.mxu0 0.0
        %1053 = vmatprep.subr.mxu0 0.0
        %1054 = vmatpush1.msra.mxu0 0.0
        %1055 = vmatprep.subr.mxu0 0.0
        %1056 = vmatpush1.msra.mxu0 0.0
        %1057 = vmatprep.subr.mxu0 0.0
        %1058 = vmatpush1.msra.mxu0 0.0
        %1059 = vmatprep.subr.mxu0 0.0
        %1060 = vmatpush1.msra.mxu0 0.0
        %1061 = vmatprep.mubr.f32.mxu0 0.0
        %1062 = vmatmul.mubr.f32.gmra.mrb[0].mxu0 %v992
        %v1063 = vpop.f32.mrb[0].mxu0
        %v1064 = vadd.f32 %v984, %v1063
        %v1065 = vpop.f32.mrb[0].mxu0
        %1066 = vmatprep.mubr.f32.mxu0 0.0
        %1067 = vmatmul.mubr.f32.gmra.mrb[0].mxu0 %v995
        %v1068 = vpop.f32.mrb[0].mxu0
        %v1069 = vadd.f32 %v989, %v1068
        %v1070 = vpop.f32.mrb[0].mxu0
        %1071 = vdwg.mxu0
        %1072 = vst [vmem:[%s371] sm:$0xff] %v1064
        %1073 = vst [vmem:[%s371 + $0x8] sm:$0xff] %v1069
        %s1074 = sand.u32 %s251, 1
        %s1075 = scalar_lea.sflag [#allocation3], %s1074
        %s1076 = sand.u32 %s251, 1
        %s1077 = smul.addr %s1076, 16
        %s1078 = scalar_lea.vmem [#allocation2], %s1077
        // Predicated region
        $region57: #{tpu_custom_call.1} parent=55 // pred_check
          %p1079 = pneg %p261
        $region58: #{tpu_custom_call.1} parent=55 // pred_check_branch
          %1081 = sbr.rel (%p1079) target = $region60
        $region59: #{tpu_custom_call.1} parent=55 // pred_region
          %s1083 = ssub.s32 256, 256
          %1084 = vsyncadd %s1075, %s1083
          %s1085 = smul.addr %s27, 2
          %s1086 = sadd.s32 %s28, %s1085
          %s1087 = smul.addr %s1086, 128
          %s1088 = scalar_lea.hbm %s9, %s1087
          %s1089 = sshll.u32 %s1078, 4
          %s1090 = int_to_ptr.vmem [resolvable:$true] %s1089
          %1095 = dma.vmem_to_hbm [thread:$0]  %s1090, 256, %s1088, %s1075, 128, 128, 8
        $region60: #{tpu_custom_call.1} parent=55 // pred_fallthru
          _
      $region56: #{tpu_custom_call.1} parent=5 // pred_fallthru
        _
      %p1096 = scmp.le.s32.totalorder 2, %s18
      // Predicated region
      $region61: #{tpu_custom_call.1} parent=5 // pred_check
        %p1097 = pneg %p1096
      $region62: #{tpu_custom_call.1} parent=5 // pred_check_branch
        %1099 = sbr.rel (%p1097) target = $region64
      $region63: #{tpu_custom_call.1} parent=5 // pred_region
        %s1100 = ssub.s32 %s18, 2
        // Predicated region
        $region65: #{tpu_custom_call.1} parent=63 // pred_check
          %p1101 = pneg %p267
        $region66: #{tpu_custom_call.1} parent=63 // pred_check_branch
          %1103 = sbr.rel (%p1101) target = $region68
        $region67: #{tpu_custom_call.1} parent=63 // pred_region
          %s1104 = sand.u32 %s252, 1
          %s1105 = scalar_lea.sflag [#allocation3], %s1104
          %s1106 = sand.u32 %s252, 1
          %s1107 = smul.addr %s1106, 16
          %s1108 = scalar_lea.vmem [#allocation2], %s1107
          %1109 = dma.done %s1105, 256
        $region68: #{tpu_custom_call.1} parent=63 // pred_fallthru
          _
      $region64: #{tpu_custom_call.1} parent=5 // pred_fallthru
        _
    $region6: #{tpu_custom_call.1} parent=1 // loop_footer
      %s22 = sadd.s32 1, %s18
    $region7: #{tpu_custom_call.1} parent=1 // loop_footer_branch
      %17 = sbr.rel target = $region3
    $region8: #{tpu_custom_call.1} parent=1 // loop_exit
      _
    %1110 = vsyncpa [#allocation3], 1
    %s1111 = scalar_lea.sflag [#allocation3], 1
    %1112 = vsyncpa %s1111, 1

// kernel: tpu_custom_call.1
$region0: #{tpu_custom_call.1}
  #allocation0 [shape = 'u32[]', space=smem, size = 0x4, offset = 0x4, fixed_abs, tag = 'smem constant byte address 0x4 - core index']
  #allocation1 [shape = 'u32[144,128]{1,0:T(1,128)}', space=vmem, size = 0x12000, scoped, tag = 'internal scratch']
  %s0 = inlined_call_operand.vmem [shape: f32[2,3,24], index: 0, kind: input, shape index: {}]
  %s1 = inlined_call_operand.vmem [shape: f32[2,3,128], index: 1, kind: input, shape index: {}]
  %s2 = inlined_call_operand.vmem [shape: f32[2,8,24], index: 2, kind: input, shape index: {}]
  %s3 = inlined_call_operand.vmem [shape: f32[32,8], index: 3, kind: input, shape index: {}]
  %s4 = inlined_call_operand.vmem [shape: f32[32,1], index: 4, kind: input, shape index: {}]
  %s5 = inlined_call_operand.vmem [shape: f32[32,32], index: 5, kind: input, shape index: {}]
  %s6 = inlined_call_operand.vmem [shape: f32[32,1], index: 6, kind: input, shape index: {}]
  %s7 = inlined_call_operand.vmem [shape: f32[16,32], index: 7, kind: input, shape index: {}]
  %s8 = inlined_call_operand.vmem [shape: f32[16,1], index: 8, kind: input, shape index: {}]
  %s9 = inlined_call_operand.hbm [shape: f32[2,16,128], index: 9, kind: output, shape index: {}]
  %s10 = sld [smem:[#allocation0]]
  $region69: #{tpu_custom_call.1} parent=0
    _
  %s12 = ssub.s32 1, %s10
  %s13 = scalar_select 0, %s12, %s10
  $region1: #{tpu_custom_call.1} parent=0
    #allocation2 [shape = 'u8[16384]{0}', space=vmem, size = 0x4000, scoped, tag = 'output window, operand 0']
    #allocation3 [shape = 's32[2]{0}', space=sflag, size = 0x8, scoped, tag = 'scoped memory for tpu_custom_call.1']
    %14 = vsyncpa [#allocation3], 0
    %s15 = scalar_lea.sflag [#allocation3], 1
    %16 = vsyncpa %s15, 0
    loop: start=0, step=1, limit=4
    $region2: #{tpu_custom_call.1} parent=1 // loop_pre_header
      _
    $region3: #{tpu_custom_call.1} parent=1 // loop_header
      %s18 = sphi 0, %s22
      %p19 = scmp.ge.s32.totalorder %s18, 4
      %s25 = sphi 0, %s37
      %s26 = sphi 0, %s33
      %s27 = sphi 0, %s25
      %s28 = sphi 0, %s26
      %s29 = sphi 0, %s27
      %s30 = sphi 0, %s28
      %s40 = sphi 0, %s42
      %s43 = sphi 0, %s40
      %s44 = sphi 0, %s43
      %s60 = sphi 0, %s44
      %s68 = sphi 0, %s70
      %s71 = sphi 0, %s68
      %s72 = sphi 0, %s71
      %s88 = sphi 0, %s72
      %s94 = sphi 0, %s96
      %s97 = sphi 0, %s94
      %s98 = sphi 0, %s97
      %s114 = sphi 0, %s98
      %s118 = sphi 0, %s118
      %s120 = sphi 0, %s118
      %s121 = sphi 0, %s120
      %s135 = sphi 0, %s121
      %s139 = sphi 0, %s139
      %s141 = sphi 0, %s139
      %s142 = sphi 0, %s141
      %s156 = sphi 0, %s142
      %s160 = sphi 0, %s160
      %s162 = sphi 0, %s160
      %s163 = sphi 0, %s162
      %s177 = sphi 0, %s163
      %s181 = sphi 0, %s181
      %s183 = sphi 0, %s181
      %s184 = sphi 0, %s183
      %s198 = sphi 0, %s184
      %s202 = sphi 0, %s202
      %s204 = sphi 0, %s202
      %s205 = sphi 0, %s204
      %s219 = sphi 0, %s205
      %s223 = sphi 0, %s223
      %s225 = sphi 0, %s223
      %s226 = sphi 0, %s225
      %s240 = sphi 0, %s226
      %s248 = sphi 0, %s250
      %s251 = sphi 0, %s248
      %s252 = sphi 0, %s251
      %s268 = sphi 0, %s252
    $region4: #{tpu_custom_call.1} parent=1 // loop_header_branch
      %21 = sbr.rel (%p19) target = $region8
    $region5: #{tpu_custom_call.1} parent=1 // loop_body
      %s23 = ssub.s32 %s18, 1
      %s24 = ssub.s32 %s18, 2
      %s31 = sadd.s32 1, %s26
      %p32 = scmp.ge.s32.totalorder %s31, 1
      %s33 = scalar_select %p32, 0, %s31
      %s34 = sadd.s32 1, %s25
      %s35 = scalar_select %p32, %s34, %s25
      %p36 = scmp.ge.s32.totalorder %s35, 2
      %s37 = scalar_select %p36, 0, %s35
      %s38 = ssub.s32 %s25, %s37
      %p39 = scmp.eq.s32.totalorder %s38, 0
      %s41 = sadd.s32 %s40, 1
      %s42 = scalar_select %p39, %s40, %s41
      %p45 = pneg %p39
      %p46 = scmp.eq.s32.totalorder %s18, 1
      %p47 = por %p45, %p46
      %p48 = scmp.ne.s32.totalorder %s40, %s43
      %p49 = scmp.eq.s32.totalorder %s18, 0
      %p50 = por %p48, %p49
      %p51 = scmp.ne.s32.totalorder %s40, %s43
      %p52 = scmp.eq.s32.totalorder %s23, 1
      %p53 = por %p51, %p52
      %p54 = scmp.ne.s32.totalorder %s43, %s44
      %p55 = scmp.eq.s32.totalorder %s23, 0
      %p56 = por %p54, %p55
      %p57 = scmp.ne.s32.totalorder %s43, %s44
      %p58 = scmp.eq.s32.totalorder %s24, 1
      %p59 = por %p57, %p58
      %p61 = scmp.ne.s32.totalorder %s44, %s60
      %p62 = scmp.eq.s32.totalorder %s24, 0
      %p63 = por %p61, %p62
      %s64 = ssub.s32 %s25, %s37
      %s65 = ssub.s32 %s26, %s33
      %s66 = sor.u32 %s64, %s65
      %p67 = scmp.eq.s32.totalorder %s66, 0
      %s69 = sadd.s32 %s68, 1
      %s70 = scalar_select %p67, %s68, %s69
      %p73 = pneg %p67
      %p74 = scmp.eq.s32.totalorder %s18, 1
      %p75 = por %p73, %p74
      %p76 = scmp.ne.s32.totalorder %s68, %s71
      %p77 = scmp.eq.s32.totalorder %s18, 0
      %p78 = por %p76, %p77
      %p79 = scmp.ne.s32.totalorder %s68, %s71
      %p80 = scmp.eq.s32.totalorder %s23, 1
      %p81 = por %p79, %p80
      %p82 = scmp.ne.s32.totalorder %s71, %s72
      %p83 = scmp.eq.s32.totalorder %s23, 0
      %p84 = por %p82, %p83
      %p85 = scmp.ne.s32.totalorder %s71, %s72
      %p86 = scmp.eq.s32.totalorder %s24, 1
      %p87 = por %p85, %p86
      %p89 = scmp.ne.s32.totalorder %s72, %s88
      %p90 = scmp.eq.s32.totalorder %s24, 0
      %p91 = por %p89, %p90
      %s92 = ssub.s32 %s25, %s37
      %p93 = scmp.eq.s32.totalorder %s92, 0
      %s95 = sadd.s32 %s94, 1
      %s96 = scalar_select %p93, %s94, %s95
      %p99 = pneg %p93
      %p100 = scmp.eq.s32.totalorder %s18, 1
      %p101 = por %p99, %p100
      %p102 = scmp.ne.s32.totalorder %s94, %s97
      %p103 = scmp.eq.s32.totalorder %s18, 0
      %p104 = por %p102, %p103
      %p105 = scmp.ne.s32.totalorder %s94, %s97
      %p106 = scmp.eq.s32.totalorder %s23, 1
      %p107 = por %p105, %p106
      %p108 = scmp.ne.s32.totalorder %s97, %s98
      %p109 = scmp.eq.s32.totalorder %s23, 0
      %p110 = por %p108, %p109
      %p111 = scmp.ne.s32.totalorder %s97, %s98
      %p112 = scmp.eq.s32.totalorder %s24, 1
      %p113 = por %p111, %p112
      %p115 = scmp.ne.s32.totalorder %s98, %s114
      %p116 = scmp.eq.s32.totalorder %s24, 0
      %p117 = por %p115, %p116
      %s119 = sadd.s32 %s118, 1
      %p122 = scmp.eq.s32.totalorder %s18, 1
      %p123 = scmp.ne.s32.totalorder %s118, %s120
      %p124 = scmp.eq.s32.totalorder %s18, 0
      %p125 = por %p123, %p124
      %p126 = scmp.ne.s32.totalorder %s118, %s120
      %p127 = scmp.eq.s32.totalorder %s23, 1
      %p128 = por %p126, %p127
      %p129 = scmp.ne.s32.totalorder %s120, %s121
      %p130 = scmp.eq.s32.totalorder %s23, 0
      %p131 = por %p129, %p130
      %p132 = scmp.ne.s32.totalorder %s120, %s121
      %p133 = scmp.eq.s32.totalorder %s24, 1
      %p134 = por %p132, %p133
      %p136 = scmp.ne.s32.totalorder %s121, %s135
      %p137 = scmp.eq.s32.totalorder %s24, 0
      %p138 = por %p136, %p137
      %s140 = sadd.s32 %s139, 1
      %p143 = scmp.eq.s32.totalorder %s18, 1
      %p144 = scmp.ne.s32.totalorder %s139, %s141
      %p145 = scmp.eq.s32.totalorder %s18, 0
      %p146 = por %p144, %p145
      %p147 = scmp.ne.s32.totalorder %s139, %s141
      %p148 = scmp.eq.s32.totalorder %s23, 1
      %p149 = por %p147, %p148
      %p150 = scmp.ne.s32.totalorder %s141, %s142
      %p151 = scmp.eq.s32.totalorder %s23, 0
      %p152 = por %p150, %p151
      %p153 = scmp.ne.s32.totalorder %s141, %s142
      %p154 = scmp.eq.s32.totalorder %s24, 1
      %p155 = por %p153, %p154
      %p157 = scmp.ne.s32.totalorder %s142, %s156
      %p158 = scmp.eq.s32.totalorder %s24, 0
      %p159 = por %p157, %p158
      %s161 = sadd.s32 %s160, 1
      %p164 = scmp.eq.s32.totalorder %s18, 1
      %p165 = scmp.ne.s32.totalorder %s160, %s162
      %p166 = scmp.eq.s32.totalorder %s18, 0
      %p167 = por %p165, %p166
      %p168 = scmp.ne.s32.totalorder %s160, %s162
      %p169 = scmp.eq.s32.totalorder %s23, 1
      %p170 = por %p168, %p169
      %p171 = scmp.ne.s32.totalorder %s162, %s163
      %p172 = scmp.eq.s32.totalorder %s23, 0
      %p173 = por %p171, %p172
      %p174 = scmp.ne.s32.totalorder %s162, %s163
      %p175 = scmp.eq.s32.totalorder %s24, 1
      %p176 = por %p174, %p175
      %p178 = scmp.ne.s32.totalorder %s163, %s177
      %p179 = scmp.eq.s32.totalorder %s24, 0
      %p180 = por %p178, %p179
      %s182 = sadd.s32 %s181, 1
      %p185 = scmp.eq.s32.totalorder %s18, 1
      %p186 = scmp.ne.s32.totalorder %s181, %s183
      %p187 = scmp.eq.s32.totalorder %s18, 0
      %p188 = por %p186, %p187
      %p189 = scmp.ne.s32.totalorder %s181, %s183
      %p190 = scmp.eq.s32.totalorder %s23, 1
      %p191 = por %p189, %p190
      %p192 = scmp.ne.s32.totalorder %s183, %s184
      %p193 = scmp.eq.s32.totalorder %s23, 0
      %p194 = por %p192, %p193
      %p195 = scmp.ne.s32.totalorder %s183, %s184
      %p196 = scmp.eq.s32.totalorder %s24, 1
      %p197 = por %p195, %p196
      %p199 = scmp.ne.s32.totalorder %s184, %s198
      %p200 = scmp.eq.s32.totalorder %s24, 0
      %p201 = por %p199, %p200
      %s203 = sadd.s32 %s202, 1
      %p206 = scmp.eq.s32.totalorder %s18, 1
      %p207 = scmp.ne.s32.totalorder %s202, %s204
      %p208 = scmp.eq.s32.totalorder %s18, 0
      %p209 = por %p207, %p208
      %p210 = scmp.ne.s32.totalorder %s202, %s204
      %p211 = scmp.eq.s32.totalorder %s23, 1
      %p212 = por %p210, %p211
      %p213 = scmp.ne.s32.totalorder %s204, %s205
      %p214 = scmp.eq.s32.totalorder %s23, 0
      %p215 = por %p213, %p214
      %p216 = scmp.ne.s32.totalorder %s204, %s205
      %p217 = scmp.eq.s32.totalorder %s24, 1
      %p218 = por %p216, %p217
      %p220 = scmp.ne.s32.totalorder %s205, %s219
      %p221 = scmp.eq.s32.totalorder %s24, 0
      %p222 = por %p220, %p221
      %s224 = sadd.s32 %s223, 1
      %p227 = scmp.eq.s32.totalorder %s18, 1
      %p228 = scmp.ne.s32.totalorder %s223, %s225
      %p229 = scmp.eq.s32.totalorder %s18, 0
      %p230 = por %p228, %p229
      %p231 = scmp.ne.s32.totalorder %s223, %s225
      %p232 = scmp.eq.s32.totalorder %s23, 1
      %p233 = por %p231, %p232
      %p234 = scmp.ne.s32.totalorder %s225, %s226
      %p235 = scmp.eq.s32.totalorder %s23, 0
      %p236 = por %p234, %p235
      %p237 = scmp.ne.s32.totalorder %s225, %s226
      %p238 = scmp.eq.s32.totalorder %s24, 1
      %p239 = por %p237, %p238
      %p241 = scmp.ne.s32.totalorder %s226, %s240
      %p242 = scmp.eq.s32.totalorder %s24, 0
      %p243 = por %p241, %p242
      %s244 = ssub.s32 %s25, %s37
      %s245 = ssub.s32 %s26, %s33
      %s246 = sor.u32 %s244, %s245
      %p247 = scmp.eq.s32.totalorder %s246, 0
      %s249 = sadd.s32 %s248, 1
      %s250 = scalar_select %p247, %s248, %s249
      %p253 = pneg %p247
      %p254 = scmp.eq.s32.totalorder %s18, 1
      %p255 = por %p253, %p254
      %p256 = scmp.ne.s32.totalorder %s248, %s251
      %p257 = scmp.eq.s32.totalorder %s18, 0
      %p258 = por %p256, %p257
      %p259 = scmp.ne.s32.totalorder %s248, %s251
      %p260 = scmp.eq.s32.totalorder %s23, 1
      %p261 = por %p259, %p260
      %p262 = scmp.ne.s32.totalorder %s251, %s252
      %p263 = scmp.eq.s32.totalorder %s23, 0
      %p264 = por %p262, %p263
      %p265 = scmp.ne.s32.totalorder %s251, %s252
      %p266 = scmp.eq.s32.totalorder %s24, 1
      %p267 = por %p265, %p266
      %p269 = scmp.ne.s32.totalorder %s252, %s268
      %p270 = scmp.eq.s32.totalorder %s24, 0
      %p271 = por %p269, %p270
      %p272 = scmp.le.s32.totalorder 1, %s18
      %p273 = scmp.lt.s32.totalorder %s18, 3
      %p274 = pnand %p272, %p273
      %p275 = pneg %p274
      // Predicated region
      $region9: #{tpu_custom_call.1} parent=5 // pred_check
        _
      $region10: #{tpu_custom_call.1} parent=5 // pred_check_branch
        %277 = sbr.rel (%p274) target = $region12
      $region11: #{tpu_custom_call.1} parent=5 // pred_region
        %s278 = ssub.s32 %s18, 1
        // Predicated region
        $region13: #{tpu_custom_call.1} parent=11 // pred_check
          %p279 = pneg %p131
        $region14: #{tpu_custom_call.1} parent=11 // pred_check_branch
          %281 = sbr.rel (%p279) target = $region16
        $region15: #{tpu_custom_call.1} parent=11 // pred_region
          _
        $region16: #{tpu_custom_call.1} parent=11 // pred_fallthru
          _
        // Predicated region
        $region17: #{tpu_custom_call.1} parent=11 // pred_check
          %p282 = pneg %p152
        $region18: #{tpu_custom_call.1} parent=11 // pred_check_branch
          %284 = sbr.rel (%p282) target = $region20
        $region19: #{tpu_custom_call.1} parent=11 // pred_region
          _
        $region20: #{tpu_custom_call.1} parent=11 // pred_fallthru
          _
        // Predicated region
        $region21: #{tpu_custom_call.1} parent=11 // pred_check
          %p285 = pneg %p173
        $region22: #{tpu_custom_call.1} parent=11 // pred_check_branch
          %287 = sbr.rel (%p285) target = $region24
        $region23: #{tpu_custom_call.1} parent=11 // pred_region
          _
        $region24: #{tpu_custom_call.1} parent=11 // pred_fallthru
          _
        // Predicated region
        $region25: #{tpu_custom_call.1} parent=11 // pred_check
          %p288 = pneg %p194
        $region26: #{tpu_custom_call.1} parent=11 // pred_check_branch
          %290 = sbr.rel (%p288) target = $region28
        $region27: #{tpu_custom_call.1} parent=11 // pred_region
          _
        $region28: #{tpu_custom_call.1} parent=11 // pred_fallthru
          _
        // Predicated region
        $region29: #{tpu_custom_call.1} parent=11 // pred_check
          %p291 = pneg %p215
        $region30: #{tpu_custom_call.1} parent=11 // pred_check_branch
          %293 = sbr.rel (%p291) target = $region32
        $region31: #{tpu_custom_call.1} parent=11 // pred_region
          _
        $region32: #{tpu_custom_call.1} parent=11 // pred_fallthru
          _
        // Predicated region
        $region33: #{tpu_custom_call.1} parent=11 // pred_check
          %p294 = pneg %p236
        $region34: #{tpu_custom_call.1} parent=11 // pred_check_branch
          %296 = sbr.rel (%p294) target = $region36
        $region35: #{tpu_custom_call.1} parent=11 // pred_region
          _
        $region36: #{tpu_custom_call.1} parent=11 // pred_fallthru
          _
      $region12: #{tpu_custom_call.1} parent=5 // pred_fallthru
        _
      %p297 = scmp.lt.s32.totalorder %s18, 2
      // Predicated region
      $region37: #{tpu_custom_call.1} parent=5 // pred_check
        %p298 = pneg %p297
      $region38: #{tpu_custom_call.1} parent=5 // pred_check_branch
        %300 = sbr.rel (%p298) target = $region40
      $region39: #{tpu_custom_call.1} parent=5 // pred_region
        // Predicated region
        $region41: #{tpu_custom_call.1} parent=39 // pred_check
          %p301 = pneg %p50
        $region42: #{tpu_custom_call.1} parent=39 // pred_check_branch
          %303 = sbr.rel (%p301) target = $region44
        $region43: #{tpu_custom_call.1} parent=39 // pred_region
          %p304 = scmp.lt.s32.totalorder %s25, 1
          %s305 = scalar_select %p304, %s25, 1
          %s306 = smul.addr %s305, 4
          %s307 = scalar_lea.vmem %s0, %s306
        $region44: #{tpu_custom_call.1} parent=39 // pred_fallthru
          _
        // Predicated region
        $region45: #{tpu_custom_call.1} parent=39 // pred_check
          %p308 = pneg %p78
        $region46: #{tpu_custom_call.1} parent=39 // pred_check_branch
          %310 = sbr.rel (%p308) target = $region48
        $region47: #{tpu_custom_call.1} parent=39 // pred_region
          %p311 = scmp.lt.s32.totalorder %s25, 1
          %s312 = scalar_select %p311, %s25, 1
          %p313 = scmp.lt.s32.totalorder %s26, 0
          %s314 = scalar_select %p313, %s26, 0
          %s315 = sadd.s32 %s314, %s312
          %s316 = smul.addr %s315, 4
          %s317 = scalar_lea.vmem %s1, %s316
        $region48: #{tpu_custom_call.1} parent=39 // pred_fallthru
          _
        // Predicated region
        $region49: #{tpu_custom_call.1} parent=39 // pred_check
          %p318 = pneg %p104
        $region50: #{tpu_custom_call.1} parent=39 // pred_check_branch
          %320 = sbr.rel (%p318) target = $region52
        $region51: #{tpu_custom_call.1} parent=39 // pred_region
          %p321 = scmp.lt.s32.totalorder %s25, 1
          %s322 = scalar_select %p321, %s25, 1
          %s323 = smul.addr %s322, 8
          %s324 = scalar_lea.vmem %s2, %s323
        $region52: #{tpu_custom_call.1} parent=39 // pred_fallthru
          _
      $region40: #{tpu_custom_call.1} parent=5 // pred_fallthru
        _
      %p325 = scmp.le.s32.totalorder 1, %s18
      %p326 = scmp.lt.s32.totalorder %s18, 3
      %p327 = pnand %p325, %p326
      %p328 = pneg %p327
      // Predicated region
      $region53: #{tpu_custom_call.1} parent=5 // pred_check
        _
      $region54: #{tpu_custom_call.1} parent=5 // pred_check_branch
        %330 = sbr.rel (%p327) target = $region56
      $region55: #{tpu_custom_call.1} parent=5 // pred_region
        %s331 = ssub.s32 %s18, 1
        %p332 = scmp.lt.s32.totalorder %s27, 1
        %s333 = scalar_select %p332, %s27, 1
        %s334 = smul.addr %s333, 4
        %s335 = scalar_lea.vmem %s0, %s334
        %p336 = pneg %p56
        %p337 = pneg %p53
        %p338 = scmp.lt.s32.totalorder %s27, 1
        %s339 = scalar_select %p338, %s27, 1
        %p340 = scmp.lt.s32.totalorder %s28, 0
        %s341 = scalar_select %p340, %s28, 0
        %s342 = sadd.s32 %s341, %s339
        %s343 = smul.addr %s342, 4
        %s344 = scalar_lea.vmem %s1, %s343
        %p345 = pneg %p84
        %p346 = pneg %p81
        %p347 = scmp.lt.s32.totalorder %s27, 1
        %s348 = scalar_select %p347, %s27, 1
        %s349 = smul.addr %s348, 8
        %s350 = scalar_lea.vmem %s2, %s349
        %p351 = pneg %p110
        %p352 = pneg %p107
        %p353 = pneg %p131
        %p354 = pneg %p128
        %p355 = pneg %p152
        %p356 = pneg %p149
        %p357 = pneg %p173
        %p358 = pneg %p170
        %p359 = pneg %p194
        %p360 = pneg %p191
        %p361 = pneg %p215
        %p362 = pneg %p212
        %p363 = pneg %p236
        %p364 = pneg %p233
        %p365 = pneg %p264
        %p366 = pneg %p261
        %s367 = sand.u32 %s251, 1
        %s368 = scalar_lea.sflag [#allocation3], %s367
        %s369 = sand.u32 %s251, 1
        %s370 = smul.addr %s369, 16
        %s371 = scalar_lea.vmem [#allocation2], %s370
        %p372 = scmp.lt.s32.totalorder %s27, 1
        %s373 = scalar_select %p372, %s27, 1
        %s374 = smul.addr %s373, 4
        %s375 = scalar_lea.vmem %s0, %s374
        %p376 = scmp.lt.s32.totalorder %s27, 1
        %s377 = scalar_select %p376, %s27, 1
        %p378 = scmp.lt.s32.totalorder %s28, 0
        %s379 = scalar_select %p378, %s28, 0
        %s380 = sadd.s32 %s379, %s377
        %s381 = smul.addr %s380, 4
        %s382 = scalar_lea.vmem %s1, %s381
        %p383 = scmp.lt.s32.totalorder %s27, 1
        %s384 = scalar_select %p383, %s27, 1
        %s385 = smul.addr %s384, 8
        %s386 = scalar_lea.vmem %s2, %s385
        %v387 = vld [vmem:[%s375] sm:$0x7]
        %v388 = vld [vmem:[%s382] sm:$0x7]
        %v389 = vld [vmem:[%s386] sm:$0xff]
        %390 = vxpose.xlu0.b32.start [1/16] %v387, 128
        %391 = vxpose.xlu0.b32.cont [2/16] 0.0, 128
        %392 = vxpose.xlu0.b32.cont [3/16] 0.0, 128
        %393 = vxpose.xlu0.b32.cont [4/16] 0.0, 128
        %394 = vxpose.xlu0.b32.cont [5/16] 0.0, 128
        %395 = vxpose.xlu0.b32.cont [6/16] 0.0, 128
        %396 = vxpose.xlu0.b32.cont [7/16] 0.0, 128
        %397 = vxpose.xlu0.b32.cont [8/16] 0.0, 128
        %398 = vxpose.xlu0.b32.cont [9/16] 0.0, 128
        %399 = vxpose.xlu0.b32.cont [10/16] 0.0, 128
        %400 = vxpose.xlu0.b32.cont [11/16] 0.0, 128
        %401 = vxpose.xlu0.b32.cont [12/16] 0.0, 128
        %402 = vxpose.xlu0.b32.cont [13/16] 0.0, 128
        %403 = vxpose.xlu0.b32.cont [14/16] 0.0, 128
        %404 = vxpose.xlu0.b32.cont [15/16] 0.0, 128
        %405 = vxpose.xlu0.b32.end [16/16] 0.0, 128
        %v406 = vpop.trf.xlu0
        %v407 = vpop.trf.xlu0
        %v408 = vpop.trf.xlu0
        %v409 = vpop.trf.xlu0
        %v410 = vpop.trf.xlu0
        %v411 = vpop.trf.xlu0
        %v412 = vpop.trf.xlu0
        %v413 = vpop.trf.xlu0
        %v414 = vpop.trf.xlu0
        %v415 = vpop.trf.xlu0
        %v416 = vpop.trf.xlu0
        %v417 = vpop.trf.xlu0
        %v418 = vpop.trf.xlu0
        %v419 = vpop.trf.xlu0
        %v420 = vpop.trf.xlu0
        %v421 = vpop.trf.xlu0
        %423 = vset.pattern.permute.xlu0 0
        %424 = vperm.xlu0 %423, %v406
        %v425 = vpop.permute.xlu0 %424
        %428 = vset.pattern.permute.xlu0 0
        %429 = vperm.xlu0 %428, %v407
        %v430 = vpop.permute.xlu0 %429
        %433 = vset.pattern.permute.xlu0 0
        %434 = vperm.xlu0 %433, %v408
        %v435 = vpop.permute.xlu0 %434
        %v437 = vlaneseq
        %v438 = vshrl.u32 %v437, 7
        %v439 = vsub.s32 0, %v438
        %v440 = vrot.slane %v388, %v439
        %v441 = vsub.f32 %v425, %v440
        %v442 = vsub.f32 %v430, %v440
        %v443 = vsub.f32 %v435, %v440
        %v444 = vmul.f32 %v441, %v441
        %v445 = vmul.f32 %v442, %v442
        %v446 = vmul.f32 %v443, %v443
        %447 = vset.pattern.permute.xlu0 1
        %448 = vperm.xlu0 %447, %v406
        %v449 = vpop.permute.xlu0 %448
        %451 = vset.pattern.permute.xlu0 1
        %452 = vperm.xlu0 %451, %v407
        %v453 = vpop.permute.xlu0 %452
        %455 = vset.pattern.permute.xlu0 1
        %456 = vperm.xlu0 %455, %v408
        %v457 = vpop.permute.xlu0 %456
        %v459 = vlaneseq
        %v460 = vshrl.u32 %v459, 7
        %v461 = vsub.s32 1, %v460
        %v462 = vrot.slane %v388, %v461
        %v463 = vsub.f32 %v449, %v462
        %v464 = vsub.f32 %v453, %v462
        %v465 = vsub.f32 %v457, %v462
        %v466 = vmul.f32 %v463, %v463
        %v467 = vmul.f32 %v464, %v464
        %v468 = vmul.f32 %v465, %v465
        %v469 = vadd.f32 %v444, %v466
        %v470 = vadd.f32 %v445, %v467
        %v471 = vadd.f32 %v446, %v468
        %472 = vset.pattern.permute.xlu0 2
        %473 = vperm.xlu0 %472, %v406
        %v474 = vpop.permute.xlu0 %473
        %476 = vset.pattern.permute.xlu0 2
        %477 = vperm.xlu0 %476, %v407
        %v478 = vpop.permute.xlu0 %477
        %480 = vset.pattern.permute.xlu0 2
        %481 = vperm.xlu0 %480, %v408
        %v482 = vpop.permute.xlu0 %481
        %v484 = vlaneseq
        %v485 = vshrl.u32 %v484, 7
        %v486 = vsub.s32 2, %v485
        %v487 = vrot.slane %v388, %v486
        %v488 = vsub.f32 %v474, %v487
        %v489 = vsub.f32 %v478, %v487
        %v490 = vsub.f32 %v482, %v487
        %v491 = vmul.f32 %v488, %v488
        %v492 = vmul.f32 %v489, %v489
        %v493 = vmul.f32 %v490, %v490
        %v494 = vadd.f32 %v469, %v491
        %v495 = vadd.f32 %v470, %v492
        %v496 = vadd.f32 %v471, %v493
        %v497 = vlaneseq
        %v498 = vshrl.u32 %v497, 7
        %v499 = vadd.s32 %v498, 8
        %v500 = vadd.s32 %v498, 16
        %v501 = vmin.f32 %v494, %v495
        %v502 = vmin.f32 %v501, %v496
        %v503 = vrot.slane %v502, 4
        %v504 = vmin.f32 %v502, %v503
        %v505 = vrot.slane %v504, 2
        %v506 = vmin.f32 %v504, %v505
        %v507 = vrot.slane %v506, 1
        %v508 = vmin.f32 %v506, %v507
        %vm509 = vcmp.eq.f32.partialorder %v494, %v508
        %vm510 = vcmp.eq.f32.partialorder %v495, %v508
        %vm511 = vcmp.eq.f32.partialorder %v496, %v508
        %v512 = vsel %vm509, %v498, 24
        %v513 = vsel %vm510, %v499, 24
        %v514 = vsel %vm511, %v500, 24
        %vm515 = vcmp.lt.s32.totalorder %v512, %v513
        %v516 = vsel %vm515, %v512, %v513
        %vm517 = vcmp.lt.s32.totalorder %v516, %v514
        %v518 = vsel %vm517, %v516, %v514
        %v519 = vrot.slane %v518, 4
        %vm520 = vcmp.lt.s32.totalorder %v518, %v519
        %v521 = vsel %vm520, %v518, %v519
        %v522 = vrot.slane %v521, 2
        %vm523 = vcmp.lt.s32.totalorder %v521, %v522
        %v524 = vsel %vm523, %v521, %v522
        %v525 = vrot.slane %v524, 1
        %vm526 = vcmp.lt.s32.totalorder %v524, %v525
        %v527 = vsel %vm526, %v524, %v525
        %vm528 = vcmp.eq.s32.totalorder %v498, %v527
        %vm529 = vcmp.eq.s32.totalorder %v499, %v527
        %vm530 = vcmp.eq.s32.totalorder %v500, %v527
        %v531 = vrsqrt.pop %v508
        %v532 = vmul.f32 %v508, %v531
        %vm533 = vcmp.eq.f32.partialorder %v508, inf
        %v534 = vsel %vm533, %v508, %v532
        %vm535 = vcmp.eq.f32.partialorder %v508, 0.0
        %v536 = vand.u32 %v508, 2147483648
        %v537 = vsel %vm535, %v536, %v534
        %v538 = vadd.f32 %v537, 1e-10
        %v539 = vrcp.pop %v538
        %v540 = vsel %vm528, %v539, 0.0
        %v541 = vsel %vm529, %v539, 0.0
        %v542 = vsel %vm530, %v539, 0.0
        %v543 = vsel %vm528, 3e+38, %v494
        %v544 = vsel %vm529, 3e+38, %v495
        %v545 = vsel %vm530, 3e+38, %v496
        %v546 = vmin.f32 %v543, %v544
        %v547 = vmin.f32 %v546, %v545
        %v548 = vrot.slane %v547, 4
        %v549 = vmin.f32 %v547, %v548
        %v550 = vrot.slane %v549, 2
        %v551 = vmin.f32 %v549, %v550
        %v552 = vrot.slane %v551, 1
        %v553 = vmin.f32 %v551, %v552
        %vm554 = vcmp.eq.f32.partialorder %v543, %v553
        %vm555 = vcmp.eq.f32.partialorder %v544, %v553
        %vm556 = vcmp.eq.f32.partialorder %v545, %v553
        %v557 = vsel %vm554, %v498, 24
        %v558 = vsel %vm555, %v499, 24
        %v559 = vsel %vm556, %v500, 24
        %vm560 = vcmp.lt.s32.totalorder %v557, %v558
        %v561 = vsel %vm560, %v557, %v558
        %vm562 = vcmp.lt.s32.totalorder %v561, %v559
        %v563 = vsel %vm562, %v561, %v559
        %v564 = vrot.slane %v563, 4
        %vm565 = vcmp.lt.s32.totalorder %v563, %v564
        %v566 = vsel %vm565, %v563, %v564
        %v567 = vrot.slane %v566, 2
        %vm568 = vcmp.lt.s32.totalorder %v566, %v567
        %v569 = vsel %vm568, %v566, %v567
        %v570 = vrot.slane %v569, 1
        %vm571 = vcmp.lt.s32.totalorder %v569, %v570
        %v572 = vsel %vm571, %v569, %v570
        %vm573 = vcmp.eq.s32.totalorder %v498, %v572
        %vm574 = vcmp.eq.s32.totalorder %v499, %v572
        %vm575 = vcmp.eq.s32.totalorder %v500, %v572
        %v576 = vrsqrt.pop %v553
        %v577 = vmul.f32 %v553, %v576
        %vm578 = vcmp.eq.f32.partialorder %v553, inf
        %v579 = vsel %vm578, %v553, %v577
        %vm580 = vcmp.eq.f32.partialorder %v553, 0.0
        %v581 = vand.u32 %v553, 2147483648
        %v582 = vsel %vm580, %v581, %v579
        %v583 = vadd.f32 %v582, 1e-10
        %v584 = vrcp.pop %v583
        %v585 = vsel %vm573, %v584, 0.0
        %v586 = vsel %vm574, %v584, 0.0
        %v587 = vsel %vm575, %v584, 0.0
        %v588 = vadd.f32 %v540, %v585
        %v589 = vadd.f32 %v541, %v586
        %v590 = vadd.f32 %v542, %v587
        %v591 = vadd.f32 %v539, %v584
        %v592 = vsel %vm573, 3e+38, %v543
        %v593 = vsel %vm574, 3e+38, %v544
        %v594 = vsel %vm575, 3e+38, %v545
        %v595 = vmin.f32 %v592, %v593
        %v596 = vmin.f32 %v595, %v594
        %v597 = vrot.slane %v596, 4
        %v598 = vmin.f32 %v596, %v597
        %v599 = vrot.slane %v598, 2
        %v600 = vmin.f32 %v598, %v599
        %v601 = vrot.slane %v600, 1
        %v602 = vmin.f32 %v600, %v601
        %vm603 = vcmp.eq.f32.partialorder %v592, %v602
        %vm604 = vcmp.eq.f32.partialorder %v593, %v602
        %vm605 = vcmp.eq.f32.partialorder %v594, %v602
        %v606 = vsel %vm603, %v498, 24
        %v607 = vsel %vm604, %v499, 24
        %v608 = vsel %vm605, %v500, 24
        %vm609 = vcmp.lt.s32.totalorder %v606, %v607
        %v610 = vsel %vm609, %v606, %v607
        %vm611 = vcmp.lt.s32.totalorder %v610, %v608
        %v612 = vsel %vm611, %v610, %v608
        %v613 = vrot.slane %v612, 4
        %vm614 = vcmp.lt.s32.totalorder %v612, %v613
        %v615 = vsel %vm614, %v612, %v613
        %v616 = vrot.slane %v615, 2
        %vm617 = vcmp.lt.s32.totalorder %v615, %v616
        %v618 = vsel %vm617, %v615, %v616
        %v619 = vrot.slane %v618, 1
        %vm620 = vcmp.lt.s32.totalorder %v618, %v619
        %v621 = vsel %vm620, %v618, %v619
        %vm622 = vcmp.eq.s32.totalorder %v498, %v621
        %vm623 = vcmp.eq.s32.totalorder %v499, %v621
        %vm624 = vcmp.eq.s32.totalorder %v500, %v621
        %v625 = vrsqrt.pop %v602
        %v626 = vmul.f32 %v602, %v625
        %vm627 = vcmp.eq.f32.partialorder %v602, inf
        %v628 = vsel %vm627, %v602, %v626
        %vm629 = vcmp.eq.f32.partialorder %v602, 0.0
        %v630 = vand.u32 %v602, 2147483648
        %v631 = vsel %vm629, %v630, %v628
        %v632 = vadd.f32 %v631, 1e-10
        %v633 = vrcp.pop %v632
        %v634 = vsel %vm622, %v633, 0.0
        %v635 = vsel %vm623, %v633, 0.0
        %v636 = vsel %vm624, %v633, 0.0
        %v637 = vadd.f32 %v588, %v634
        %v638 = vadd.f32 %v589, %v635
        %v639 = vadd.f32 %v590, %v636
        %v640 = vadd.f32 %v591, %v633
        %vm641 = vcmask 195584
        %v643 = vsel %vm641, %v389, 0
        %645 = vmatprep.subr.mxu0 0.0
        %646 = vmatpush1.msra.mxu0 %v637
        %647 = vmatprep.subr.mxu0 0.0
        %648 = vmatpush1.msra.mxu0 %v638
        %649 = vmatprep.subr.mxu0 0.0
        %650 = vmatpush1.msra.mxu0 %v639
        %651 = vmatprep.subr.mxu0 0.0
        %652 = vmatpush1.msra.mxu0 0.0
        %653 = vmatprep.subr.mxu0 0.0
        %654 = vmatpush1.msra.mxu0 0.0
        %655 = vmatprep.subr.mxu0 0.0
        %656 = vmatpush1.msra.mxu0 0.0
        %657 = vmatprep.subr.mxu0 0.0
        %658 = vmatpush1.msra.mxu0 0.0
        %659 = vmatprep.subr.mxu0 0.0
        %660 = vmatpush1.msra.mxu0 0.0
        %661 = vmatprep.subr.mxu0 0.0
        %662 = vmatpush1.msra.mxu0 0.0
        %663 = vmatprep.subr.mxu0 0.0
        %664 = vmatpush1.msra.mxu0 0.0
        %665 = vmatprep.subr.mxu0 0.0
        %666 = vmatpush1.msra.mxu0 0.0
        %667 = vmatprep.subr.mxu0 0.0
        %668 = vmatpush1.msra.mxu0 0.0
        %669 = vmatprep.subr.mxu0 0.0
        %670 = vmatpush1.msra.mxu0 0.0
        %671 = vmatprep.subr.mxu0 0.0
        %672 = vmatpush1.msra.mxu0 0.0
        %673 = vmatprep.subr.mxu0 0.0
        %674 = vmatpush1.msra.mxu0 0.0
        %675 = vmatprep.subr.mxu0 0.0
        %676 = vmatpush1.msra.mxu0 0.0
        %677 = vmatprep.subr.mxu0 0.0
        %678 = vmatpush1.msra.mxu0 0.0
        %679 = vmatprep.subr.mxu0 0.0
        %680 = vmatpush1.msra.mxu0 0.0
        %681 = vmatprep.subr.mxu0 0.0
        %682 = vmatpush1.msra.mxu0 0.0
        %683 = vmatprep.subr.mxu0 0.0
        %684 = vmatpush1.msra.mxu0 0.0
        %685 = vmatprep.subr.mxu0 0.0
        %686 = vmatpush1.msra.mxu0 0.0
        %687 = vmatprep.subr.mxu0 0.0
        %688 = vmatpush1.msra.mxu0 0.0
        %689 = vmatprep.subr.mxu0 0.0
        %690 = vmatpush1.msra.mxu0 0.0
        %691 = vmatprep.subr.mxu0 0.0
        %692 = vmatpush1.msra.mxu0 0.0
        %693 = vmatprep.subr.mxu0 0.0
        %694 = vmatpush1.msra.mxu0 0.0
        %695 = vmatprep.subr.mxu0 0.0
        %696 = vmatpush1.msra.mxu0 0.0
        %697 = vmatprep.subr.mxu0 0.0
        %698 = vmatpush1.msra.mxu0 0.0
        %699 = vmatprep.subr.mxu0 0.0
        %700 = vmatpush1.msra.mxu0 0.0
        %701 = vmatprep.subr.mxu0 0.0
        %702 = vmatpush1.msra.mxu0 0.0
        %703 = vmatprep.subr.mxu0 0.0
        %704 = vmatpush1.msra.mxu0 0.0
        %705 = vmatprep.subr.mxu0 0.0
        %706 = vmatpush1.msra.mxu0 0.0
        %707 = vmatprep.subr.mxu0 0.0
        %708 = vmatpush1.msra.mxu0 0.0
        %709 = vmatprep.mubr.f32.mxu0 0.0
        %710 = vmatmul.mubr.f32.gmra.mrb[0].mxu0 %v643
        %v711 = vpop.f32.mrb[0].mxu0
        %v712 = vadd.f32 0.0, %v711
        %v713 = vpop.f32.mrb[0].mxu0
        %714 = vdwg.mxu0
        %v715 = vrcp.pop %v640
        %v716 = vmul.f32 %v712, %v715
        %v717 = vld [vmem:[%s3] sm:$0xff]
        %v718 = vld [vmem:[%s3 + $0x8] sm:$0xff]
        %v719 = vld [vmem:[%s3 + $0x10] sm:$0xff]
        %v720 = vld [vmem:[%s3 + $0x18] sm:$0xff]
        %v721 = vld [vmem:[%s4] sm:$0xff]
        %v722 = vld [vmem:[%s4 + $0x8] sm:$0xff]
        %v723 = vld [vmem:[%s4 + $0x10] sm:$0xff]
        %v724 = vld [vmem:[%s4 + $0x18] sm:$0xff]
        %726 = vset.pattern.permute.xlu0 0
        %727 = vperm.xlu0 %726, %v721
        %v728 = vpop.permute.xlu0 %727
        %731 = vset.pattern.permute.xlu0 0
        %732 = vperm.xlu0 %731, %v722
        %v733 = vpop.permute.xlu0 %732
        %736 = vset.pattern.permute.xlu0 0
        %737 = vperm.xlu0 %736, %v723
        %v738 = vpop.permute.xlu0 %737
        %741 = vset.pattern.permute.xlu0 0
        %742 = vperm.xlu0 %741, %v724
        %v743 = vpop.permute.xlu0 %742
        %vm745 = vcmask 64512
        %v747 = vsel %vm745, %v717, 0
        %v750 = vsel %vm745, %v718, 0
        %v753 = vsel %vm745, %v719, 0
        %v756 = vsel %vm745, %v720, 0
        %758 = vmatprep.subr.mxu0 0.0
        %759 = vmatpush1.msra.mxu0 %v716
        %760 = vmatprep.subr.mxu0 0.0
        %761 = vmatpush1.msra.mxu0 0.0
        %762 = vmatprep.subr.mxu0 0.0
        %763 = vmatpush1.msra.mxu0 0.0
        %764 = vmatprep.subr.mxu0 0.0
        %765 = vmatpush1.msra.mxu0 0.0
        %766 = vmatprep.subr.mxu0 0.0
        %767 = vmatpush1.msra.mxu0 0.0
        %768 = vmatprep.subr.mxu0 0.0
        %769 = vmatpush1.msra.mxu0 0.0
        %770 = vmatprep.subr.mxu0 0.0
        %771 = vmatpush1.msra.mxu0 0.0
        %772 = vmatprep.subr.mxu0 0.0
        %773 = vmatpush1.msra.mxu0 0.0
        %774 = vmatprep.subr.mxu0 0.0
        %775 = vmatpush1.msra.mxu0 0.0
        %776 = vmatprep.subr.mxu0 0.0
        %777 = vmatpush1.msra.mxu0 0.0
        %778 = vmatprep.subr.mxu0 0.0
        %779 = vmatpush1.msra.mxu0 0.0
        %780 = vmatprep.subr.mxu0 0.0
        %781 = vmatpush1.msra.mxu0 0.0
        %782 = vmatprep.subr.mxu0 0.0
        %783 = vmatpush1.msra.mxu0 0.0
        %784 = vmatprep.subr.mxu0 0.0
        %785 = vmatpush1.msra.mxu0 0.0
        %786 = vmatprep.subr.mxu0 0.0
        %787 = vmatpush1.msra.mxu0 0.0
        %788 = vmatprep.subr.mxu0 0.0
        %789 = vmatpush1.msra.mxu0 0.0
        %790 = vmatprep.subr.mxu0 0.0
        %791 = vmatpush1.msra.mxu0 0.0
        %792 = vmatprep.subr.mxu0 0.0
        %793 = vmatpush1.msra.mxu0 0.0
        %794 = vmatprep.subr.mxu0 0.0
        %795 = vmatpush1.msra.mxu0 0.0
        %796 = vmatprep.subr.mxu0 0.0
        %797 = vmatpush1.msra.mxu0 0.0
        %798 = vmatprep.subr.mxu0 0.0
        %799 = vmatpush1.msra.mxu0 0.0
        %800 = vmatprep.subr.mxu0 0.0
        %801 = vmatpush1.msra.mxu0 0.0
        %802 = vmatprep.subr.mxu0 0.0
        %803 = vmatpush1.msra.mxu0 0.0
        %804 = vmatprep.subr.mxu0 0.0
        %805 = vmatpush1.msra.mxu0 0.0
        %806 = vmatprep.subr.mxu0 0.0
        %807 = vmatpush1.msra.mxu0 0.0
        %808 = vmatprep.subr.mxu0 0.0
        %809 = vmatpush1.msra.mxu0 0.0
        %810 = vmatprep.subr.mxu0 0.0
        %811 = vmatpush1.msra.mxu0 0.0
        %812 = vmatprep.subr.mxu0 0.0
        %813 = vmatpush1.msra.mxu0 0.0
        %814 = vmatprep.subr.mxu0 0.0
        %815 = vmatpush1.msra.mxu0 0.0
        %816 = vmatprep.subr.mxu0 0.0
        %817 = vmatpush1.msra.mxu0 0.0
        %818 = vmatprep.subr.mxu0 0.0
        %819 = vmatpush1.msra.mxu0 0.0
        %820 = vmatprep.subr.mxu0 0.0
        %821 = vmatpush1.msra.mxu0 0.0
        %822 = vmatprep.mubr.f32.mxu0 0.0
        %823 = vmatmul.mubr.f32.gmra.mrb[0].mxu0 %v747
        %v824 = vpop.f32.mrb[0].mxu0
        %v825 = vadd.f32 %v728, %v824
        %v826 = vpop.f32.mrb[0].mxu0
        %827 = vmatprep.mubr.f32.mxu0 0.0
        %828 = vmatmul.mubr.f32.gmra.mrb[0].mxu0 %v750
        %v829 = vpop.f32.mrb[0].mxu0
        %v830 = vadd.f32 %v733, %v829
        %v831 = vpop.f32.mrb[0].mxu0
        %832 = vmatprep.mubr.f32.mxu0 0.0
        %833 = vmatmul.mubr.f32.gmra.mrb[0].mxu0 %v753
        %v834 = vpop.f32.mrb[0].mxu0
        %v835 = vadd.f32 %v738, %v834
        %v836 = vpop.f32.mrb[0].mxu0
        %837 = vmatprep.mubr.f32.mxu0 0.0
        %838 = vmatmul.mubr.f32.gmra.mrb[0].mxu0 %v756
        %v839 = vpop.f32.mrb[0].mxu0
        %v840 = vadd.f32 %v743, %v839
        %v841 = vpop.f32.mrb[0].mxu0
        %842 = vdwg.mxu0
        %v843 = vmax.f32 %v825, 0.0
        %v844 = vmax.f32 %v830, 0.0
        %v845 = vmax.f32 %v835, 0.0
        %v846 = vmax.f32 %v840, 0.0
        %v847 = vld [vmem:[%s5] sm:$0xff]
        %v848 = vld [vmem:[%s5 + $0x8] sm:$0xff]
        %v849 = vld [vmem:[%s5 + $0x10] sm:$0xff]
        %v850 = vld [vmem:[%s5 + $0x18] sm:$0xff]
        %v851 = vld [vmem:[%s6] sm:$0xff]
        %v852 = vld [vmem:[%s6 + $0x8] sm:$0xff]
        %v853 = vld [vmem:[%s6 + $0x10] sm:$0xff]
        %v854 = vld [vmem:[%s6 + $0x18] sm:$0xff]
        %856 = vset.pattern.permute.xlu0 0
        %857 = vperm.xlu0 %856, %v851
        %v858 = vpop.permute.xlu0 %857
        %861 = vset.pattern.permute.xlu0 0
        %862 = vperm.xlu0 %861, %v852
        %v863 = vpop.permute.xlu0 %862
        %866 = vset.pattern.permute.xlu0 0
        %867 = vperm.xlu0 %866, %v853
        %v868 = vpop.permute.xlu0 %867
        %871 = vset.pattern.permute.xlu0 0
        %872 = vperm.xlu0 %871, %v854
        %v873 = vpop.permute.xlu0 %872
        %vm875 = vcmask 261120
        %v877 = vsel %vm875, %v847, 0
        %v880 = vsel %vm875, %v848, 0
        %v883 = vsel %vm875, %v849, 0
        %v886 = vsel %vm875, %v850, 0
        %888 = vmatprep.subr.mxu0 0.0
        %889 = vmatpush1.msra.mxu0 %v843
        %890 = vmatprep.subr.mxu0 0.0
        %891 = vmatpush1.msra.mxu0 %v844
        %892 = vmatprep.subr.mxu0 0.0
        %893 = vmatpush1.msra.mxu0 %v845
        %894 = vmatprep.subr.mxu0 0.0
        %895 = vmatpush1.msra.mxu0 %v846
        %896 = vmatprep.subr.mxu0 0.0
        %897 = vmatpush1.msra.mxu0 0.0
        %898 = vmatprep.subr.mxu0 0.0
        %899 = vmatpush1.msra.mxu0 0.0
        %900 = vmatprep.subr.mxu0 0.0
        %901 = vmatpush1.msra.mxu0 0.0
        %902 = vmatprep.subr.mxu0 0.0
        %903 = vmatpush1.msra.mxu0 0.0
        %904 = vmatprep.subr.mxu0 0.0
        %905 = vmatpush1.msra.mxu0 0.0
        %906 = vmatprep.subr.mxu0 0.0
        %907 = vmatpush1.msra.mxu0 0.0
        %908 = vmatprep.subr.mxu0 0.0
        %909 = vmatpush1.msra.mxu0 0.0
        %910 = vmatprep.subr.mxu0 0.0
        %911 = vmatpush1.msra.mxu0 0.0
        %912 = vmatprep.subr.mxu0 0.0
        %913 = vmatpush1.msra.mxu0 0.0
        %914 = vmatprep.subr.mxu0 0.0
        %915 = vmatpush1.msra.mxu0 0.0
        %916 = vmatprep.subr.mxu0 0.0
        %917 = vmatpush1.msra.mxu0 0.0
        %918 = vmatprep.subr.mxu0 0.0
        %919 = vmatpush1.msra.mxu0 0.0
        %920 = vmatprep.subr.mxu0 0.0
        %921 = vmatpush1.msra.mxu0 0.0
        %922 = vmatprep.subr.mxu0 0.0
        %923 = vmatpush1.msra.mxu0 0.0
        %924 = vmatprep.subr.mxu0 0.0
        %925 = vmatpush1.msra.mxu0 0.0
        %926 = vmatprep.subr.mxu0 0.0
        %927 = vmatpush1.msra.mxu0 0.0
        %928 = vmatprep.subr.mxu0 0.0
        %929 = vmatpush1.msra.mxu0 0.0
        %930 = vmatprep.subr.mxu0 0.0
        %931 = vmatpush1.msra.mxu0 0.0
        %932 = vmatprep.subr.mxu0 0.0
        %933 = vmatpush1.msra.mxu0 0.0
        %934 = vmatprep.subr.mxu0 0.0
        %935 = vmatpush1.msra.mxu0 0.0
        %936 = vmatprep.subr.mxu0 0.0
        %937 = vmatpush1.msra.mxu0 0.0
        %938 = vmatprep.subr.mxu0 0.0
        %939 = vmatpush1.msra.mxu0 0.0
        %940 = vmatprep.subr.mxu0 0.0
        %941 = vmatpush1.msra.mxu0 0.0
        %942 = vmatprep.subr.mxu0 0.0
        %943 = vmatpush1.msra.mxu0 0.0
        %944 = vmatprep.subr.mxu0 0.0
        %945 = vmatpush1.msra.mxu0 0.0
        %946 = vmatprep.subr.mxu0 0.0
        %947 = vmatpush1.msra.mxu0 0.0
        %948 = vmatprep.subr.mxu0 0.0
        %949 = vmatpush1.msra.mxu0 0.0
        %950 = vmatprep.subr.mxu0 0.0
        %951 = vmatpush1.msra.mxu0 0.0
        %952 = vmatprep.mubr.f32.mxu0 0.0
        %953 = vmatmul.mubr.f32.gmra.mrb[0].mxu0 %v877
        %v954 = vpop.f32.mrb[0].mxu0
        %v955 = vadd.f32 %v858, %v954
        %v956 = vpop.f32.mrb[0].mxu0
        %957 = vmatprep.mubr.f32.mxu0 0.0
        %958 = vmatmul.mubr.f32.gmra.mrb[0].mxu0 %v880
        %v959 = vpop.f32.mrb[0].mxu0
        %v960 = vadd.f32 %v863, %v959
        %v961 = vpop.f32.mrb[0].mxu0
        %962 = vmatprep.mubr.f32.mxu0 0.0
        %963 = vmatmul.mubr.f32.gmra.mrb[0].mxu0 %v883
        %v964 = vpop.f32.mrb[0].mxu0
        %v965 = vadd.f32 %v868, %v964
        %v966 = vpop.f32.mrb[0].mxu0
        %967 = vmatprep.mubr.f32.mxu0 0.0
        %968 = vmatmul.mubr.f32.gmra.mrb[0].mxu0 %v886
        %v969 = vpop.f32.mrb[0].mxu0
        %v970 = vadd.f32 %v873, %v969
        %v971 = vpop.f32.mrb[0].mxu0
        %972 = vdwg.mxu0
        %v973 = vmax.f32 %v955, 0.0
        %v974 = vmax.f32 %v960, 0.0
        %v975 = vmax.f32 %v965, 0.0
        %v976 = vmax.f32 %v970, 0.0
        %v977 = vld [vmem:[%s7] sm:$0xff]
        %v978 = vld [vmem:[%s7 + $0x8] sm:$0xff]
        %v979 = vld [vmem:[%s8] sm:$0xff]
        %v980 = vld [vmem:[%s8 + $0x8] sm:$0xff]
        %982 = vset.pattern.permute.xlu0 0
        %983 = vperm.xlu0 %982, %v979
        %v984 = vpop.permute.xlu0 %983
        %987 = vset.pattern.permute.xlu0 0
        %988 = vperm.xlu0 %987, %v980
        %v989 = vpop.permute.xlu0 %988
        %v992 = vsel %vm875, %v977, 0
        %v995 = vsel %vm875, %v978, 0
        %997 = vmatprep.subr.mxu0 0.0
        %998 = vmatpush1.msra.mxu0 %v973
        %999 = vmatprep.subr.mxu0 0.0
        %1000 = vmatpush1.msra.mxu0 %v974
        %1001 = vmatprep.subr.mxu0 0.0
        %1002 = vmatpush1.msra.mxu0 %v975
        %1003 = vmatprep.subr.mxu0 0.0
        %1004 = vmatpush1.msra.mxu0 %v976
        %1005 = vmatprep.subr.mxu0 0.0
        %1006 = vmatpush1.msra.mxu0 0.0
        %1007 = vmatprep.subr.mxu0 0.0
        %1008 = vmatpush1.msra.mxu0 0.0
        %1009 = vmatprep.subr.mxu0 0.0
        %1010 = vmatpush1.msra.mxu0 0.0
        %1011 = vmatprep.subr.mxu0 0.0
        %1012 = vmatpush1.msra.mxu0 0.0
        %1013 = vmatprep.subr.mxu0 0.0
        %1014 = vmatpush1.msra.mxu0 0.0
        %1015 = vmatprep.subr.mxu0 0.0
        %1016 = vmatpush1.msra.mxu0 0.0
        %1017 = vmatprep.subr.mxu0 0.0
        %1018 = vmatpush1.msra.mxu0 0.0
        %1019 = vmatprep.subr.mxu0 0.0
        %1020 = vmatpush1.msra.mxu0 0.0
        %1021 = vmatprep.subr.mxu0 0.0
        %1022 = vmatpush1.msra.mxu0 0.0
        %1023 = vmatprep.subr.mxu0 0.0
        %1024 = vmatpush1.msra.mxu0 0.0
        %1025 = vmatprep.subr.mxu0 0.0
        %1026 = vmatpush1.msra.mxu0 0.0
        %1027 = vmatprep.subr.mxu0 0.0
        %1028 = vmatpush1.msra.mxu0 0.0
        %1029 = vmatprep.subr.mxu0 0.0
        %1030 = vmatpush1.msra.mxu0 0.0
        %1031 = vmatprep.subr.mxu0 0.0
        %1032 = vmatpush1.msra.mxu0 0.0
        %1033 = vmatprep.subr.mxu0 0.0
        %1034 = vmatpush1.msra.mxu0 0.0
        %1035 = vmatprep.subr.mxu0 0.0
        %1036 = vmatpush1.msra.mxu0 0.0
        %1037 = vmatprep.subr.mxu0 0.0
        %1038 = vmatpush1.msra.mxu0 0.0
        %1039 = vmatprep.subr.mxu0 0.0
        %1040 = vmatpush1.msra.mxu0 0.0
        %1041 = vmatprep.subr.mxu0 0.0
        %1042 = vmatpush1.msra.mxu0 0.0
        %1043 = vmatprep.subr.mxu0 0.0
        %1044 = vmatpush1.msra.mxu0 0.0
        %1045 = vmatprep.subr.mxu0 0.0
        %1046 = vmatpush1.msra.mxu0 0.0
        %1047 = vmatprep.subr.mxu0 0.0
        %1048 = vmatpush1.msra.mxu0 0.0
        %1049 = vmatprep.subr.mxu0 0.0
        %1050 = vmatpush1.msra.mxu0 0.0
        %1051 = vmatprep.subr.mxu0 0.0
        %1052 = vmatpush1.msra.mxu0 0.0
        %1053 = vmatprep.subr.mxu0 0.0
        %1054 = vmatpush1.msra.mxu0 0.0
        %1055 = vmatprep.subr.mxu0 0.0
        %1056 = vmatpush1.msra.mxu0 0.0
        %1057 = vmatprep.subr.mxu0 0.0
        %1058 = vmatpush1.msra.mxu0 0.0
        %1059 = vmatprep.subr.mxu0 0.0
        %1060 = vmatpush1.msra.mxu0 0.0
        %1061 = vmatprep.mubr.f32.mxu0 0.0
        %1062 = vmatmul.mubr.f32.gmra.mrb[0].mxu0 %v992
        %v1063 = vpop.f32.mrb[0].mxu0
        %v1064 = vadd.f32 %v984, %v1063
        %v1065 = vpop.f32.mrb[0].mxu0
        %1066 = vmatprep.mubr.f32.mxu0 0.0
        %1067 = vmatmul.mubr.f32.gmra.mrb[0].mxu0 %v995
        %v1068 = vpop.f32.mrb[0].mxu0
        %v1069 = vadd.f32 %v989, %v1068
        %v1070 = vpop.f32.mrb[0].mxu0
        %1071 = vdwg.mxu0
        %1072 = vst [vmem:[%s371] sm:$0xff] %v1064
        %1073 = vst [vmem:[%s371 + $0x8] sm:$0xff] %v1069
        %s1074 = sand.u32 %s251, 1
        %s1075 = scalar_lea.sflag [#allocation3], %s1074
        %s1076 = sand.u32 %s251, 1
        %s1077 = smul.addr %s1076, 16
        %s1078 = scalar_lea.vmem [#allocation2], %s1077
        // Predicated region
        $region57: #{tpu_custom_call.1} parent=55 // pred_check
          %p1079 = pneg %p261
        $region58: #{tpu_custom_call.1} parent=55 // pred_check_branch
          %1081 = sbr.rel (%p1079) target = $region60
        $region59: #{tpu_custom_call.1} parent=55 // pred_region
          %s1083 = ssub.s32 256, 256
          %1084 = vsyncadd %s1075, %s1083
          %s1085 = smul.addr %s27, 2
          %s1086 = sadd.s32 %s28, %s1085
          %s1087 = smul.addr %s1086, 128
          %s1088 = scalar_lea.hbm %s9, %s1087
          %s1089 = sshll.u32 %s1078, 4
          %s1090 = int_to_ptr.vmem [resolvable:$true] %s1089
          %1095 = dma.vmem_to_hbm [thread:$0]  %s1090, 256, %s1088, %s1075, 128, 128, 8
        $region60: #{tpu_custom_call.1} parent=55 // pred_fallthru
          _
      $region56: #{tpu_custom_call.1} parent=5 // pred_fallthru
        _
      %p1096 = scmp.le.s32.totalorder 2, %s18
      // Predicated region
      $region61: #{tpu_custom_call.1} parent=5 // pred_check
        %p1097 = pneg %p1096
      $region62: #{tpu_custom_call.1} parent=5 // pred_check_branch
        %1099 = sbr.rel (%p1097) target = $region64
      $region63: #{tpu_custom_call.1} parent=5 // pred_region
        %s1100 = ssub.s32 %s18, 2
        // Predicated region
        $region65: #{tpu_custom_call.1} parent=63 // pred_check
          %p1101 = pneg %p267
        $region66: #{tpu_custom_call.1} parent=63 // pred_check_branch
          %1103 = sbr.rel (%p1101) target = $region68
        $region67: #{tpu_custom_call.1} parent=63 // pred_region
          %s1104 = sand.u32 %s252, 1
          %s1105 = scalar_lea.sflag [#allocation3], %s1104
          %s1106 = sand.u32 %s252, 1
          %s1107 = smul.addr %s1106, 16
          %s1108 = scalar_lea.vmem [#allocation2], %s1107
          %1109 = dma.done %s1105, 256
        $region68: #{tpu_custom_call.1} parent=63 // pred_fallthru
          _
      $region64: #{tpu_custom_call.1} parent=5 // pred_fallthru
        _
    $region6: #{tpu_custom_call.1} parent=1 // loop_footer
      %s22 = sadd.s32 1, %s18
    $region7: #{tpu_custom_call.1} parent=1 // loop_footer_branch
      %17 = sbr.rel target = $region3
    $region8: #{tpu_custom_call.1} parent=1 // loop_exit
      _
    %1110 = vsyncpa [#allocation3], 1
    %s1111 = scalar_lea.sflag [#allocation3], 1
    %1112 = vsyncpa %s1111, 1

</llo_original>
